<compile_context>
chip_gen: v5e
topology: v5e:2x2
jax: 0.10.0
libtpu: 0.0.40
codegen_flags: <defaults>
</compile_context>

<pallas_src>
import math

import jax
import jax.numpy as jnp
from jax.experimental import pallas as pl
from jax.experimental.pallas import tpu as pltpu

HIDDEN = 312                          # rubert-tiny2 hidden size
IN_DIM = 2 * HIDDEN                   # 624 (concat of text + target pooled)
LAYER_DIMS = [(624, 512), (512, 256), (256, 64), (64, 16), (16, 1)]

# Lane-padded layer dims (all feature dims multiples of 128 -> lane-dense
# loads and unmasked MXU passes).
PAD_IN = 640
PADDED_DIMS = [(640, 512), (512, 256), (256, 128), (128, 128), (128, 128)]
BIAS_OFFS = (0, 512, 768, 896, 1024, 1152)   # 128-aligned prefix offsets
MAX_TILE_B = 512                              # rows per grid step (upper bound)


def _round_up(x, m):
    return ((x + m - 1) // m) * m


def _batch_layout(batch):
    """Pick padded batch (power-of-two bucketed) and the batch tile size."""
    if batch <= MAX_TILE_B:
        b_pad = max(16, pl.next_power_of_2(batch))   # bf16 sublane tile = 16
    else:
        b_pad = _round_up(batch, MAX_TILE_B)
    tile_b = min(MAX_TILE_B, b_pad)
    # v7x megacore: once there is enough work, keep >= 2 grid steps so the
    # "parallel" batch axis can shard across both TensorCores.
    if b_pad >= 256 and b_pad // tile_b < 2:
        tile_b = b_pad // 2
    return b_pad, tile_b


def _mlp_head_kernel(x_ref,
                     w1_ref, w2_ref, w3_ref, w4_ref, w5_ref,
                     b_ref, o_ref):
    """Fused head: 5x (bf16 matmul, f32 accum + bias), ReLU x4, exact sigmoid."""

    def dense(h_bf16, w_ref, k):
        acc = jnp.dot(h_bf16, w_ref[...], preferred_element_type=jnp.float32)
        return acc + b_ref[:, BIAS_OFFS[k]:BIAS_OFFS[k + 1]]   # static, 128-aligned

    h = x_ref[...]                                             # bf16 [tile_b, 640]
    h = jnp.maximum(dense(h, w1_ref, 0), 0.0).astype(jnp.bfloat16)
    h = jnp.maximum(dense(h, w2_ref, 1), 0.0).astype(jnp.bfloat16)
    h = jnp.maximum(dense(h, w3_ref, 2), 0.0).astype(jnp.bfloat16)
    h = jnp.maximum(dense(h, w4_ref, 3), 0.0).astype(jnp.bfloat16)
    logits = dense(h, w5_ref, 4)                               # f32 [tile_b, 128]
    col = logits[:, 0:1]                                       # only real column
    o_ref[...] = 1.0 / (1.0 + jnp.exp(-col))                   # exact sigmoid


def prepare_params(params):
    """One-time (model-load) prep: pad to lane tiles, cast to bf16, concat biases."""
    ws, bs = [], []
    for (w, b), (pin, pout) in zip(params, PADDED_DIMS):
        wp = jnp.zeros((pin, pout), jnp.float32).at[:w.shape[0], :w.shape[1]].set(w)
        ws.append(wp.astype(jnp.bfloat16))
        bs.append(jnp.zeros((1, pout), jnp.float32).at[:, :b.shape[1]].set(b))
    bias_cat = jnp.concatenate(bs, axis=1)                     # (1, 1152) f32
    return tuple(ws), bias_cat


@jax.jit
def bert_scorer_head(output_text, output_target, prepared):
    """output_text/output_target: [B, 312] f32 pooled embeddings."""
    ws, bias_cat = prepared
    batch = output_text.shape[0]
    b_pad, tile_b = _batch_layout(batch)

    # Fused concat + batch/lane zero-pad + bf16 cast (single producer fusion
    # under jit); padded rows/lanes are zero, so they are inert through the MLP.
    x = (jnp.zeros((b_pad, PAD_IN), jnp.float32)
         .at[:batch, :HIDDEN].set(output_text)
         .at[:batch, HIDDEN:IN_DIM].set(output_target)
         .astype(jnp.bfloat16))

    resident = lambda i: (0, 0)   # weights/bias: same block every step -> VMEM-resident
    out = pl.pallas_call(
        _mlp_head_kernel,
        out_shape=jax.ShapeDtypeStruct((b_pad, 1), jnp.float32),
        grid=(b_pad // tile_b,),
        in_specs=[pl.BlockSpec((tile_b, PAD_IN), lambda i: (i, 0))]
        + [pl.BlockSpec(w.shape, resident) for w in ws]
        + [pl.BlockSpec(bias_cat.shape, resident)],
        out_specs=pl.BlockSpec((tile_b, 1), lambda i: (i, 0)),
        compiler_params=pltpu.CompilerParams(
            dimension_semantics=("parallel",),
            vmem_limit_bytes=32 * 1024 * 1024),
    )(x, *ws, bias_cat)

    return out[:batch, :]        # drop padded batch rows -> [B, 1]


def init_params(key):
    """Deterministic init mimicking nn.Linear default: U(-1/sqrt(fan_in), +)."""
    params = []
    for fan_in, fan_out in LAYER_DIMS:
        key, kw, kb = jax.random.split(key, 3)
        bound = 1.0 / math.sqrt(fan_in)
        w = jax.random.uniform(kw, (fan_in, fan_out), jnp.float32, -bound, bound)
        b = jax.random.uniform(kb, (1, fan_out), jnp.float32, -bound, bound)
        params.append((w, b))
    return params


def reference_head(output_text, output_target, prepared):
    """Pure-JAX reference using the same bf16-quantized padded weights/activations."""
    ws, bias_cat = prepared
    batch = output_text.shape[0]
    emb = jnp.concatenate([output_text, output_target], axis=1)     # [B, 624]
    h = (jnp.zeros((batch, PAD_IN), jnp.float32)
         .at[:, :IN_DIM].set(emb).astype(jnp.bfloat16))
    logits = None
    for k, w in enumerate(ws):
        acc = (jnp.dot(h.astype(jnp.float32), w.astype(jnp.float32))
               + bias_cat[:, BIAS_OFFS[k]:BIAS_OFFS[k + 1]])
        if k < len(ws) - 1:
            h = jnp.maximum(acc, 0.0).astype(jnp.bfloat16)
        else:
            logits = acc
    return jax.nn.sigmoid(logits[:, :1])                            # [B, 1]


if __name__ == "__main__":
    key = jax.random.PRNGKey(0)
    key, k_text, k_target, k_params = jax.random.split(key, 4)

    batch = 2
    # Synthetic "pooled" BERT outputs for text and target (hidden=312 each).
    # TODO(synk): real model would obtain these from the frozen rubert-tiny2 encoder.
    output_text = jax.random.normal(k_text, (batch, HIDDEN), jnp.float32)
    output_target = jax.random.normal(k_target, (batch, HIDDEN), jnp.float32)

    params = init_params(k_params)
    prepared = prepare_params(params)          # one-time, model-load-time prep

    out = bert_scorer_head(output_text, output_target, prepared)
    out = jax.block_until_ready(out)

    ref = reference_head(output_text, output_target, prepared)
    assert out.shape == (batch, 1)
    # Same bf16-quantized weights on both sides and an exact sigmoid in the
    # kernel -> only MXU accumulation-order differences remain.
    assert jnp.allclose(out, ref, atol=1e-3, rtol=1e-3)

    print("KERNEL_OK")
</pallas_src>

<mosaic_0001>
module attributes {stable_mosaic.version = 11 : i64} {
  func.func @_mlp_head_kernel(%arg0: i32, %arg1: memref<16x640xbf16, #tpu.memory_space<vmem>>, %arg2: memref<640x512xbf16, #tpu.memory_space<vmem>>, %arg3: memref<512x256xbf16, #tpu.memory_space<vmem>>, %arg4: memref<256x128xbf16, #tpu.memory_space<vmem>>, %arg5: memref<128x128xbf16, #tpu.memory_space<vmem>>, %arg6: memref<128x128xbf16, #tpu.memory_space<vmem>>, %arg7: memref<1x1152xf32, #tpu.memory_space<vmem>>, %arg8: memref<16x1xf32, #tpu.memory_space<vmem>>) attributes {dimension_semantics = [#tpu.dimension_semantics<parallel>], iteration_bounds = array<i64: 1>, scalar_prefetch = 0 : i64, scratch_operands = 0 : i64, tpu.core_type = #tpu.core_type<tc>, window_params = [{transform_indices = @transform_0, window_bounds = array<i64: 16, 640>}, {pipeline_mode = #tpu.pipeline_mode<synchronous>, transform_indices = @transform_1, window_bounds = array<i64: 640, 512>}, {pipeline_mode = #tpu.pipeline_mode<synchronous>, transform_indices = @transform_2, window_bounds = array<i64: 512, 256>}, {pipeline_mode = #tpu.pipeline_mode<synchronous>, transform_indices = @transform_3, window_bounds = array<i64: 256, 128>}, {pipeline_mode = #tpu.pipeline_mode<synchronous>, transform_indices = @transform_4, window_bounds = array<i64: 128, 128>}, {pipeline_mode = #tpu.pipeline_mode<synchronous>, transform_indices = @transform_5, window_bounds = array<i64: 128, 128>}, {pipeline_mode = #tpu.pipeline_mode<synchronous>, transform_indices = @transform_6, window_bounds = array<i64: 1, 1152>}, {transform_indices = @transform_7, window_bounds = array<i64: 16, 1>}]} {
    %c0 = arith.constant 0 : index
    %c0_0 = arith.constant 0 : index
    %0 = vector.load %arg1[%c0, %c0_0] : memref<16x640xbf16, #tpu.memory_space<vmem>>, vector<16x640xbf16>
    %c0_1 = arith.constant 0 : index
    %c0_2 = arith.constant 0 : index
    %1 = vector.load %arg2[%c0_1, %c0_2] : memref<640x512xbf16, #tpu.memory_space<vmem>>, vector<640x512xbf16>
    %cst = arith.constant dense<0.000000e+00> : vector<16x512xf32>
    %2 = tpu.matmul %0, %1, %cst {dimension_numbers = #tpu.dot_dimension_numbers<[1], [0], [0], [1], [0, 0, 1, 1], [], []>} : vector<16x640xbf16>, vector<640x512xbf16>, vector<16x512xf32> -> vector<16x512xf32>
    %c0_3 = arith.constant 0 : index
    %c0_4 = arith.constant 0 : index
    %3 = vector.load %arg7[%c0_3, %c0_4] : memref<1x1152xf32, #tpu.memory_space<vmem>>, vector<1x512xf32>
    %4 = vector.broadcast %3 : vector<1x512xf32> to vector<16x512xf32>
    %5 = arith.addf %2, %4 : vector<16x512xf32>
    %cst_5 = arith.constant 0.000000e+00 : f32
    %6 = vector.broadcast %cst_5 : f32 to vector<16x512xf32>
    %7 = arith.maximumf %5, %6 : vector<16x512xf32>
    %8 = arith.truncf %7 : vector<16x512xf32> to vector<16x512xbf16>
    %c0_6 = arith.constant 0 : index
    %c0_7 = arith.constant 0 : index
    %9 = vector.load %arg3[%c0_6, %c0_7] : memref<512x256xbf16, #tpu.memory_space<vmem>>, vector<512x256xbf16>
    %cst_8 = arith.constant dense<0.000000e+00> : vector<16x256xf32>
    %10 = tpu.matmul %8, %9, %cst_8 {dimension_numbers = #tpu.dot_dimension_numbers<[1], [0], [0], [1], [0, 0, 1, 1], [], []>} : vector<16x512xbf16>, vector<512x256xbf16>, vector<16x256xf32> -> vector<16x256xf32>
    %c0_9 = arith.constant 0 : index
    %c512 = arith.constant 512 : index
    %11 = vector.load %arg7[%c0_9, %c512] : memref<1x1152xf32, #tpu.memory_space<vmem>>, vector<1x256xf32>
    %12 = vector.broadcast %11 : vector<1x256xf32> to vector<16x256xf32>
    %13 = arith.addf %10, %12 : vector<16x256xf32>
    %cst_10 = arith.constant 0.000000e+00 : f32
    %14 = vector.broadcast %cst_10 : f32 to vector<16x256xf32>
    %15 = arith.maximumf %13, %14 : vector<16x256xf32>
    %16 = arith.truncf %15 : vector<16x256xf32> to vector<16x256xbf16>
    %c0_11 = arith.constant 0 : index
    %c0_12 = arith.constant 0 : index
    %17 = vector.load %arg4[%c0_11, %c0_12] : memref<256x128xbf16, #tpu.memory_space<vmem>>, vector<256x128xbf16>
    %cst_13 = arith.constant dense<0.000000e+00> : vector<16x128xf32>
    %18 = tpu.matmul %16, %17, %cst_13 {dimension_numbers = #tpu.dot_dimension_numbers<[1], [0], [0], [1], [0, 0, 1, 1], [], []>} : vector<16x256xbf16>, vector<256x128xbf16>, vector<16x128xf32> -> vector<16x128xf32>
    %c0_14 = arith.constant 0 : index
    %c768 = arith.constant 768 : index
    %19 = vector.load %arg7[%c0_14, %c768] : memref<1x1152xf32, #tpu.memory_space<vmem>>, vector<1x128xf32>
    %20 = vector.broadcast %19 : vector<1x128xf32> to vector<16x128xf32>
    %21 = arith.addf %18, %20 : vector<16x128xf32>
    %cst_15 = arith.constant 0.000000e+00 : f32
    %22 = vector.broadcast %cst_15 : f32 to vector<16x128xf32>
    %23 = arith.maximumf %21, %22 : vector<16x128xf32>
    %24 = arith.truncf %23 : vector<16x128xf32> to vector<16x128xbf16>
    %c0_16 = arith.constant 0 : index
    %c0_17 = arith.constant 0 : index
    %25 = vector.load %arg5[%c0_16, %c0_17] : memref<128x128xbf16, #tpu.memory_space<vmem>>, vector<128x128xbf16>
    %cst_18 = arith.constant dense<0.000000e+00> : vector<16x128xf32>
    %26 = tpu.matmul %24, %25, %cst_18 {dimension_numbers = #tpu.dot_dimension_numbers<[1], [0], [0], [1], [0, 0, 1, 1], [], []>} : vector<16x128xbf16>, vector<128x128xbf16>, vector<16x128xf32> -> vector<16x128xf32>
    %c0_19 = arith.constant 0 : index
    %c896 = arith.constant 896 : index
    %27 = vector.load %arg7[%c0_19, %c896] : memref<1x1152xf32, #tpu.memory_space<vmem>>, vector<1x128xf32>
    %28 = vector.broadcast %27 : vector<1x128xf32> to vector<16x128xf32>
    %29 = arith.addf %26, %28 : vector<16x128xf32>
    %cst_20 = arith.constant 0.000000e+00 : f32
    %30 = vector.broadcast %cst_20 : f32 to vector<16x128xf32>
    %31 = arith.maximumf %29, %30 : vector<16x128xf32>
    %32 = arith.truncf %31 : vector<16x128xf32> to vector<16x128xbf16>
    %c0_21 = arith.constant 0 : index
    %c0_22 = arith.constant 0 : index
    %33 = vector.load %arg6[%c0_21, %c0_22] : memref<128x128xbf16, #tpu.memory_space<vmem>>, vector<128x128xbf16>
    %cst_23 = arith.constant dense<0.000000e+00> : vector<16x128xf32>
    %34 = tpu.matmul %32, %33, %cst_23 {dimension_numbers = #tpu.dot_dimension_numbers<[1], [0], [0], [1], [0, 0, 1, 1], [], []>} : vector<16x128xbf16>, vector<128x128xbf16>, vector<16x128xf32> -> vector<16x128xf32>
    %c0_24 = arith.constant 0 : index
    %c1024 = arith.constant 1024 : index
    %35 = vector.load %arg7[%c0_24, %c1024] : memref<1x1152xf32, #tpu.memory_space<vmem>>, vector<1x128xf32>
    %36 = vector.broadcast %35 : vector<1x128xf32> to vector<16x128xf32>
    %37 = arith.addf %34, %36 : vector<16x128xf32>
    %38 = vector.extract_strided_slice %37 {offsets = [0, 0], sizes = [16, 1], strides = [1, 1]} : vector<16x128xf32> to vector<16x1xf32>
    %cst_25 = arith.constant 0.000000e+00 : f32
    %39 = vector.broadcast %cst_25 : f32 to vector<16x1xf32>
    %40 = arith.subf %39, %38 : vector<16x1xf32>
    %41 = math.exp %40 : vector<16x1xf32>
    %cst_26 = arith.constant 1.000000e+00 : f32
    %42 = vector.broadcast %cst_26 : f32 to vector<16x1xf32>
    %43 = arith.addf %42, %41 : vector<16x1xf32>
    %cst_27 = arith.constant 1.000000e+00 : f32
    %44 = vector.broadcast %cst_27 : f32 to vector<16x1xf32>
    %45 = arith.divf %44, %43 : vector<16x1xf32>
    %c0_28 = arith.constant 0 : index
    %c0_29 = arith.constant 0 : index
    %46 = vector.load %arg8[%c0_28, %c0_29] : memref<16x1xf32, #tpu.memory_space<vmem>>, vector<16x1xf32>
    tpu.vector_store %arg8[%c0_28, %c0_29], %45 {strides = array<i32>} : memref<16x1xf32, #tpu.memory_space<vmem>>, vector<16x1xf32>,
    return
  }
  func.func @transform_0(%arg0: i32) -> (i32, i32) {
    %c0_i32 = arith.constant 0 : i32
    %c0_i32_0 = arith.constant 0 : i32
    return %arg0, %c0_i32 : i32, i32
  }
  func.func @transform_1(%arg0: i32) -> (i32, i32) {
    %c0_i32 = arith.constant 0 : i32
    %c0_i32_0 = arith.constant 0 : i32
    %c0_i32_1 = arith.constant 0 : i32
    return %c0_i32, %c0_i32_0 : i32, i32
  }
  func.func @transform_2(%arg0: i32) -> (i32, i32) {
    %c0_i32 = arith.constant 0 : i32
    %c0_i32_0 = arith.constant 0 : i32
    %c0_i32_1 = arith.constant 0 : i32
    return %c0_i32, %c0_i32_0 : i32, i32
  }
  func.func @transform_3(%arg0: i32) -> (i32, i32) {
    %c0_i32 = arith.constant 0 : i32
    %c0_i32_0 = arith.constant 0 : i32
    %c0_i32_1 = arith.constant 0 : i32
    return %c0_i32, %c0_i32_0 : i32, i32
  }
  func.func @transform_4(%arg0: i32) -> (i32, i32) {
    %c0_i32 = arith.constant 0 : i32
    %c0_i32_0 = arith.constant 0 : i32
    %c0_i32_1 = arith.constant 0 : i32
    return %c0_i32, %c0_i32_0 : i32, i32
  }
  func.func @transform_5(%arg0: i32) -> (i32, i32) {
    %c0_i32 = arith.constant 0 : i32
    %c0_i32_0 = arith.constant 0 : i32
    %c0_i32_1 = arith.constant 0 : i32
    return %c0_i32, %c0_i32_0 : i32, i32
  }
  func.func @transform_6(%arg0: i32) -> (i32, i32) {
    %c0_i32 = arith.constant 0 : i32
    %c0_i32_0 = arith.constant 0 : i32
    %c0_i32_1 = arith.constant 0 : i32
    return %c0_i32, %c0_i32_0 : i32, i32
  }
  func.func @transform_7(%arg0: i32) -> (i32, i32) {
    %c0_i32 = arith.constant 0 : i32
    %c0_i32_0 = arith.constant 0 : i32
    return %arg0, %c0_i32 : i32, i32
  }
}

</mosaic_0001>

<llo_original>
// kernel: bert_scorer_head.1
$region0: #{bert_scorer_head.1}
  #allocation0 [shape = 'u32[]', space=smem, size = 0x4, offset = 0x4, fixed_abs, tag = 'smem constant byte address 0x4 - core index']
  #allocation1 [shape = 'u32[72,128]{1,0:T(1,128)}', space=vmem, size = 0x9000, scoped, tag = 'internal scratch']
  %s0 = inlined_call_operand.vmem [shape: bf16[16,640], index: 0, kind: input, shape index: {}]
  %s1 = inlined_call_operand.hbm [shape: bf16[640,512], index: 1, kind: input, shape index: {}]
  %s2 = inlined_call_operand.hbm [shape: bf16[512,256], index: 2, kind: input, shape index: {}]
  %s3 = inlined_call_operand.hbm [shape: bf16[256,128], index: 3, kind: input, shape index: {}]
  %s4 = inlined_call_operand.vmem [shape: bf16[128,128], index: 4, kind: input, shape index: {}]
  %s5 = inlined_call_operand.hbm [shape: bf16[128,128], index: 5, kind: input, shape index: {}]
  %s6 = inlined_call_operand.vmem [shape: f32[1,1152], index: 6, kind: input, shape index: {}]
  %s7 = inlined_call_operand.vmem [shape: f32[16,1], index: 7, kind: output, shape index: {}]
  %s8 = sld [smem:[#allocation0]]
  $region54: #{bert_scorer_head.1} parent=0
    _
  %s10 = ssub.s32 1, %s8
  %s11 = scalar_select 0, %s10, %s8
  $region1: #{bert_scorer_head.1} parent=0
    #allocation2 [shape = 'u8[655360]{0}', space=vmem, size = 0xa0000, scoped, tag = 'input window, operand 1, single buffered']
    #allocation3 [shape = 's32[1]{0}', space=sflag, size = 0x4, scoped, tag = 'scoped memory for bert_scorer_head.1']
    #allocation4 [shape = 'u8[262144]{0}', space=vmem, size = 0x40000, scoped, tag = 'input window, operand 2, single buffered']
    #allocation5 [shape = 's32[1]{0}', space=sflag, size = 0x4, scoped, tag = 'scoped memory for bert_scorer_head.1']
    #allocation6 [shape = 'u8[65536]{0}', space=vmem, size = 0x10000, scoped, tag = 'input window, operand 3, single buffered']
    #allocation7 [shape = 'u8[32768]{0}', space=vmem, size = 0x8000, scoped, tag = 'input window, operand 5, single buffered']
    #allocation8 [shape = 's32[1]{0}', space=sflag, size = 0x4, scoped, tag = 'scoped memory for bert_scorer_head.1']
    %12 = vsyncpa [#allocation3], 0
    %13 = vsyncpa [#allocation5], 0
    %14 = vsyncpa [#allocation8], 0
    // Predicated region
    $region2: #{bert_scorer_head.1} parent=1 // pred_check
      _
    $region3: #{bert_scorer_head.1} parent=1 // pred_check_branch
      %16 = sbr.rel (0) target = $region5
    $region4: #{bert_scorer_head.1} parent=1 // pred_region
      _
    $region5: #{bert_scorer_head.1} parent=1 // pred_fallthru
      _
    // Predicated region
    $region6: #{bert_scorer_head.1} parent=1 // pred_check
      _
    $region7: #{bert_scorer_head.1} parent=1 // pred_check_branch
      %18 = sbr.rel (0) target = $region9
    $region8: #{bert_scorer_head.1} parent=1 // pred_region
      %20 = vsyncadd [#allocation3], 0
      %s21 = sshll.u32 %s1, 4
      %s22 = int_to_ptr.hbm [resolvable:$true] %s21
      %s23 = sshll.u32 [#allocation2], 4
      %s24 = int_to_ptr.vmem [resolvable:$true] %s23
      %29 = dma.hbm_to_vmem [thread:$0]  %s22, 20480, %s24, [#allocation3], 256, 256, 16
    $region9: #{bert_scorer_head.1} parent=1 // pred_fallthru
      _
    // Predicated region
    $region10: #{bert_scorer_head.1} parent=1 // pred_check
      _
    $region11: #{bert_scorer_head.1} parent=1 // pred_check_branch
      %31 = sbr.rel (0) target = $region13
    $region12: #{bert_scorer_head.1} parent=1 // pred_region
      %33 = vsyncadd [#allocation5], 0
      %s34 = sshll.u32 %s2, 4
      %s35 = int_to_ptr.hbm [resolvable:$true] %s34
      %s36 = sshll.u32 [#allocation4], 4
      %s37 = int_to_ptr.vmem [resolvable:$true] %s36
      %42 = dma.hbm_to_vmem [thread:$0]  %s35, 8192, %s37, [#allocation5], 128, 128, 8
    $region13: #{bert_scorer_head.1} parent=1 // pred_fallthru
      _
    // Predicated region
    $region14: #{bert_scorer_head.1} parent=1 // pred_check
      _
    $region15: #{bert_scorer_head.1} parent=1 // pred_check_branch
      %44 = sbr.rel (0) target = $region17
    $region16: #{bert_scorer_head.1} parent=1 // pred_region
      %46 = vsyncadd [#allocation5], 0
      %s47 = sshll.u32 %s3, 4
      %s48 = int_to_ptr.hbm [resolvable:$true] %s47
      %s49 = sshll.u32 [#allocation6], 4
      %s50 = int_to_ptr.vmem [resolvable:$true] %s49
      %55 = dma.hbm_to_vmem [thread:$0]  %s48, 2048, %s50, [#allocation5], 64, 64, 4
    $region17: #{bert_scorer_head.1} parent=1 // pred_fallthru
      _
    // Predicated region
    $region18: #{bert_scorer_head.1} parent=1 // pred_check
      _
    $region19: #{bert_scorer_head.1} parent=1 // pred_check_branch
      %57 = sbr.rel (0) target = $region21
    $region20: #{bert_scorer_head.1} parent=1 // pred_region
      _
    $region21: #{bert_scorer_head.1} parent=1 // pred_fallthru
      _
    // Predicated region
    $region22: #{bert_scorer_head.1} parent=1 // pred_check
      _
    $region23: #{bert_scorer_head.1} parent=1 // pred_check_branch
      %59 = sbr.rel (0) target = $region25
    $region24: #{bert_scorer_head.1} parent=1 // pred_region
      %61 = vsyncadd [#allocation8], 0
      %s62 = sshll.u32 %s5, 4
      %s63 = int_to_ptr.hbm [resolvable:$true] %s62
      %s64 = sshll.u32 [#allocation7], 4
      %s65 = int_to_ptr.vmem [resolvable:$true] %s64
      %70 = dma.hbm_to_vmem [thread:$0]  %s63, 1024, %s65, [#allocation8], 64, 64, 4
    $region25: #{bert_scorer_head.1} parent=1 // pred_fallthru
      _
    // Predicated region
    $region26: #{bert_scorer_head.1} parent=1 // pred_check
      _
    $region27: #{bert_scorer_head.1} parent=1 // pred_check_branch
      %72 = sbr.rel (0) target = $region29
    $region28: #{bert_scorer_head.1} parent=1 // pred_region
      _
    $region29: #{bert_scorer_head.1} parent=1 // pred_fallthru
      _
    // Predicated region
    $region30: #{bert_scorer_head.1} parent=1 // pred_check
      _
    $region31: #{bert_scorer_head.1} parent=1 // pred_check_branch
      %74 = sbr.rel (0) target = $region33
    $region32: #{bert_scorer_head.1} parent=1 // pred_region
      %76 = dma.done [#allocation3], 20480
    $region33: #{bert_scorer_head.1} parent=1 // pred_fallthru
      _
    // Predicated region
    $region34: #{bert_scorer_head.1} parent=1 // pred_check
      _
    $region35: #{bert_scorer_head.1} parent=1 // pred_check_branch
      %78 = sbr.rel (0) target = $region37
    $region36: #{bert_scorer_head.1} parent=1 // pred_region
      %80 = dma.done [#allocation5], 8192
    $region37: #{bert_scorer_head.1} parent=1 // pred_fallthru
      _
    // Predicated region
    $region38: #{bert_scorer_head.1} parent=1 // pred_check
      _
    $region39: #{bert_scorer_head.1} parent=1 // pred_check_branch
      %82 = sbr.rel (0) target = $region41
    $region40: #{bert_scorer_head.1} parent=1 // pred_region
      %84 = dma.done [#allocation5], 2048
    $region41: #{bert_scorer_head.1} parent=1 // pred_fallthru
      _
    // Predicated region
    $region42: #{bert_scorer_head.1} parent=1 // pred_check
      _
    $region43: #{bert_scorer_head.1} parent=1 // pred_check_branch
      %86 = sbr.rel (0) target = $region45
    $region44: #{bert_scorer_head.1} parent=1 // pred_region
      %88 = dma.done [#allocation8], 1024
    $region45: #{bert_scorer_head.1} parent=1 // pred_fallthru
      _
    %v89 = vld [vmem:[%s0] sm:$0xff]
    %v90 = vld [vmem:[%s0 + $0x8] sm:$0xff]
    %v91 = vld [vmem:[%s0 + $0x10] sm:$0xf]
    %v92 = vld [vmem:[%s0 + $0x14] sm:$0xff]
    %v93 = vld [vmem:[%s0 + $0x1c] sm:$0xff]
    %v94 = vld [vmem:[%s0 + $0x24] sm:$0xf]
    %v95 = vld [vmem:[#allocation2] sm:$0xff]
    %v96 = vld [vmem:[#allocation2 + $0x8] sm:$0xff]
    %v97 = vld [vmem:[#allocation2 + $0x10] sm:$0xff]
    %v98 = vld [vmem:[#allocation2 + $0x18] sm:$0xff]
    %v99 = vld [vmem:[#allocation2 + $0x20] sm:$0xff]
    %v100 = vld [vmem:[#allocation2 + $0x28] sm:$0xff]
    %v101 = vld [vmem:[#allocation2 + $0x30] sm:$0xff]
    %v102 = vld [vmem:[#allocation2 + $0x38] sm:$0xff]
    %v103 = vld [vmem:[#allocation2 + $0x40] sm:$0xff]
    %v104 = vld [vmem:[#allocation2 + $0x48] sm:$0xff]
    %v105 = vld [vmem:[#allocation2 + $0x50] sm:$0xff]
    %v106 = vld [vmem:[#allocation2 + $0x58] sm:$0xff]
    %v107 = vld [vmem:[#allocation2 + $0x60] sm:$0xff]
    %v108 = vld [vmem:[#allocation2 + $0x68] sm:$0xff]
    %v109 = vld [vmem:[#allocation2 + $0x70] sm:$0xff]
    %v110 = vld [vmem:[#allocation2 + $0x78] sm:$0xff]
    %v111 = vld [vmem:[#allocation2 + $0x80] sm:$0xff]
    %v112 = vld [vmem:[#allocation2 + $0x88] sm:$0xff]
    %v113 = vld [vmem:[#allocation2 + $0x90] sm:$0xff]
    %v114 = vld [vmem:[#allocation2 + $0x98] sm:$0xff]
    %v115 = vld [vmem:[#allocation2 + $0xa0] sm:$0xff]
    %v116 = vld [vmem:[#allocation2 + $0xa8] sm:$0xff]
    %v117 = vld [vmem:[#allocation2 + $0xb0] sm:$0xff]
    %v118 = vld [vmem:[#allocation2 + $0xb8] sm:$0xff]
    %v119 = vld [vmem:[#allocation2 + $0xc0] sm:$0xff]
    %v120 = vld [vmem:[#allocation2 + $0xc8] sm:$0xff]
    %v121 = vld [vmem:[#allocation2 + $0xd0] sm:$0xff]
    %v122 = vld [vmem:[#allocation2 + $0xd8] sm:$0xff]
    %v123 = vld [vmem:[#allocation2 + $0xe0] sm:$0xff]
    %v124 = vld [vmem:[#allocation2 + $0xe8] sm:$0xff]
    %v125 = vld [vmem:[#allocation2 + $0xf0] sm:$0xff]
    %v126 = vld [vmem:[#allocation2 + $0xf8] sm:$0xff]
    %v127 = vld [vmem:[#allocation2 + $0x100] sm:$0xff]
    %v128 = vld [vmem:[#allocation2 + $0x108] sm:$0xff]
    %v129 = vld [vmem:[#allocation2 + $0x110] sm:$0xff]
    %v130 = vld [vmem:[#allocation2 + $0x118] sm:$0xff]
    %v131 = vld [vmem:[#allocation2 + $0x120] sm:$0xff]
    %v132 = vld [vmem:[#allocation2 + $0x128] sm:$0xff]
    %v133 = vld [vmem:[#allocation2 + $0x130] sm:$0xff]
    %v134 = vld [vmem:[#allocation2 + $0x138] sm:$0xff]
    %v135 = vld [vmem:[#allocation2 + $0x140] sm:$0xff]
    %v136 = vld [vmem:[#allocation2 + $0x148] sm:$0xff]
    %v137 = vld [vmem:[#allocation2 + $0x150] sm:$0xff]
    %v138 = vld [vmem:[#allocation2 + $0x158] sm:$0xff]
    %v139 = vld [vmem:[#allocation2 + $0x160] sm:$0xff]
    %v140 = vld [vmem:[#allocation2 + $0x168] sm:$0xff]
    %v141 = vld [vmem:[#allocation2 + $0x170] sm:$0xff]
    %v142 = vld [vmem:[#allocation2 + $0x178] sm:$0xff]
    %v143 = vld [vmem:[#allocation2 + $0x180] sm:$0xff]
    %v144 = vld [vmem:[#allocation2 + $0x188] sm:$0xff]
    %v145 = vld [vmem:[#allocation2 + $0x190] sm:$0xff]
    %v146 = vld [vmem:[#allocation2 + $0x198] sm:$0xff]
    %v147 = vld [vmem:[#allocation2 + $0x1a0] sm:$0xff]
    %v148 = vld [vmem:[#allocation2 + $0x1a8] sm:$0xff]
    %v149 = vld [vmem:[#allocation2 + $0x1b0] sm:$0xff]
    %v150 = vld [vmem:[#allocation2 + $0x1b8] sm:$0xff]
    %v151 = vld [vmem:[#allocation2 + $0x1c0] sm:$0xff]
    %v152 = vld [vmem:[#allocation2 + $0x1c8] sm:$0xff]
    %v153 = vld [vmem:[#allocation2 + $0x1d0] sm:$0xff]
    %v154 = vld [vmem:[#allocation2 + $0x1d8] sm:$0xff]
    %v155 = vld [vmem:[#allocation2 + $0x1e0] sm:$0xff]
    %v156 = vld [vmem:[#allocation2 + $0x1e8] sm:$0xff]
    %v157 = vld [vmem:[#allocation2 + $0x1f0] sm:$0xff]
    %v158 = vld [vmem:[#allocation2 + $0x1f8] sm:$0xff]
    %v159 = vld [vmem:[#allocation2 + $0x200] sm:$0xff]
    %v160 = vld [vmem:[#allocation2 + $0x208] sm:$0xff]
    %v161 = vld [vmem:[#allocation2 + $0x210] sm:$0xff]
    %v162 = vld [vmem:[#allocation2 + $0x218] sm:$0xff]
    %v163 = vld [vmem:[#allocation2 + $0x220] sm:$0xff]
    %v164 = vld [vmem:[#allocation2 + $0x228] sm:$0xff]
    %v165 = vld [vmem:[#allocation2 + $0x230] sm:$0xff]
    %v166 = vld [vmem:[#allocation2 + $0x238] sm:$0xff]
    %v167 = vld [vmem:[#allocation2 + $0x240] sm:$0xff]
    %v168 = vld [vmem:[#allocation2 + $0x248] sm:$0xff]
    %v169 = vld [vmem:[#allocation2 + $0x250] sm:$0xff]
    %v170 = vld [vmem:[#allocation2 + $0x258] sm:$0xff]
    %v171 = vld [vmem:[#allocation2 + $0x260] sm:$0xff]
    %v172 = vld [vmem:[#allocation2 + $0x268] sm:$0xff]
    %v173 = vld [vmem:[#allocation2 + $0x270] sm:$0xff]
    %v174 = vld [vmem:[#allocation2 + $0x278] sm:$0xff]
    %v175 = vld [vmem:[#allocation2 + $0x280] sm:$0xff]
    %v176 = vld [vmem:[#allocation2 + $0x288] sm:$0xff]
    %v177 = vld [vmem:[#allocation2 + $0x290] sm:$0xff]
    %v178 = vld [vmem:[#allocation2 + $0x298] sm:$0xff]
    %v179 = vld [vmem:[#allocation2 + $0x2a0] sm:$0xff]
    %v180 = vld [vmem:[#allocation2 + $0x2a8] sm:$0xff]
    %v181 = vld [vmem:[#allocation2 + $0x2b0] sm:$0xff]
    %v182 = vld [vmem:[#allocation2 + $0x2b8] sm:$0xff]
    %v183 = vld [vmem:[#allocation2 + $0x2c0] sm:$0xff]
    %v184 = vld [vmem:[#allocation2 + $0x2c8] sm:$0xff]
    %v185 = vld [vmem:[#allocation2 + $0x2d0] sm:$0xff]
    %v186 = vld [vmem:[#allocation2 + $0x2d8] sm:$0xff]
    %v187 = vld [vmem:[#allocation2 + $0x2e0] sm:$0xff]
    %v188 = vld [vmem:[#allocation2 + $0x2e8] sm:$0xff]
    %v189 = vld [vmem:[#allocation2 + $0x2f0] sm:$0xff]
    %v190 = vld [vmem:[#allocation2 + $0x2f8] sm:$0xff]
    %v191 = vld [vmem:[#allocation2 + $0x300] sm:$0xff]
    %v192 = vld [vmem:[#allocation2 + $0x308] sm:$0xff]
    %v193 = vld [vmem:[#allocation2 + $0x310] sm:$0xff]
    %v194 = vld [vmem:[#allocation2 + $0x318] sm:$0xff]
    %v195 = vld [vmem:[#allocation2 + $0x320] sm:$0xff]
    %v196 = vld [vmem:[#allocation2 + $0x328] sm:$0xff]
    %v197 = vld [vmem:[#allocation2 + $0x330] sm:$0xff]
    %v198 = vld [vmem:[#allocation2 + $0x338] sm:$0xff]
    %v199 = vld [vmem:[#allocation2 + $0x340] sm:$0xff]
    %v200 = vld [vmem:[#allocation2 + $0x348] sm:$0xff]
    %v201 = vld [vmem:[#allocation2 + $0x350] sm:$0xff]
    %v202 = vld [vmem:[#allocation2 + $0x358] sm:$0xff]
    %v203 = vld [vmem:[#allocation2 + $0x360] sm:$0xff]
    %v204 = vld [vmem:[#allocation2 + $0x368] sm:$0xff]
    %v205 = vld [vmem:[#allocation2 + $0x370] sm:$0xff]
    %v206 = vld [vmem:[#allocation2 + $0x378] sm:$0xff]
    %v207 = vld [vmem:[#allocation2 + $0x380] sm:$0xff]
    %v208 = vld [vmem:[#allocation2 + $0x388] sm:$0xff]
    %v209 = vld [vmem:[#allocation2 + $0x390] sm:$0xff]
    %v210 = vld [vmem:[#allocation2 + $0x398] sm:$0xff]
    %v211 = vld [vmem:[#allocation2 + $0x3a0] sm:$0xff]
    %v212 = vld [vmem:[#allocation2 + $0x3a8] sm:$0xff]
    %v213 = vld [vmem:[#allocation2 + $0x3b0] sm:$0xff]
    %v214 = vld [vmem:[#allocation2 + $0x3b8] sm:$0xff]
    %v215 = vld [vmem:[#allocation2 + $0x3c0] sm:$0xff]
    %v216 = vld [vmem:[#allocation2 + $0x3c8] sm:$0xff]
    %v217 = vld [vmem:[#allocation2 + $0x3d0] sm:$0xff]
    %v218 = vld [vmem:[#allocation2 + $0x3d8] sm:$0xff]
    %v219 = vld [vmem:[#allocation2 + $0x3e0] sm:$0xff]
    %v220 = vld [vmem:[#allocation2 + $0x3e8] sm:$0xff]
    %v221 = vld [vmem:[#allocation2 + $0x3f0] sm:$0xff]
    %v222 = vld [vmem:[#allocation2 + $0x3f8] sm:$0xff]
    %v223 = vld [vmem:[#allocation2 + $0x400] sm:$0xff]
    %v224 = vld [vmem:[#allocation2 + $0x408] sm:$0xff]
    %v225 = vld [vmem:[#allocation2 + $0x410] sm:$0xff]
    %v226 = vld [vmem:[#allocation2 + $0x418] sm:$0xff]
    %v227 = vld [vmem:[#allocation2 + $0x420] sm:$0xff]
    %v228 = vld [vmem:[#allocation2 + $0x428] sm:$0xff]
    %v229 = vld [vmem:[#allocation2 + $0x430] sm:$0xff]
    %v230 = vld [vmem:[#allocation2 + $0x438] sm:$0xff]
    %v231 = vld [vmem:[#allocation2 + $0x440] sm:$0xff]
    %v232 = vld [vmem:[#allocation2 + $0x448] sm:$0xff]
    %v233 = vld [vmem:[#allocation2 + $0x450] sm:$0xff]
    %v234 = vld [vmem:[#allocation2 + $0x458] sm:$0xff]
    %v235 = vld [vmem:[#allocation2 + $0x460] sm:$0xff]
    %v236 = vld [vmem:[#allocation2 + $0x468] sm:$0xff]
    %v237 = vld [vmem:[#allocation2 + $0x470] sm:$0xff]
    %v238 = vld [vmem:[#allocation2 + $0x478] sm:$0xff]
    %v239 = vld [vmem:[#allocation2 + $0x480] sm:$0xff]
    %v240 = vld [vmem:[#allocation2 + $0x488] sm:$0xff]
    %v241 = vld [vmem:[#allocation2 + $0x490] sm:$0xff]
    %v242 = vld [vmem:[#allocation2 + $0x498] sm:$0xff]
    %v243 = vld [vmem:[#allocation2 + $0x4a0] sm:$0xff]
    %v244 = vld [vmem:[#allocation2 + $0x4a8] sm:$0xff]
    %v245 = vld [vmem:[#allocation2 + $0x4b0] sm:$0xff]
    %v246 = vld [vmem:[#allocation2 + $0x4b8] sm:$0xff]
    %v247 = vld [vmem:[#allocation2 + $0x4c0] sm:$0xff]
    %v248 = vld [vmem:[#allocation2 + $0x4c8] sm:$0xff]
    %v249 = vld [vmem:[#allocation2 + $0x4d0] sm:$0xff]
    %v250 = vld [vmem:[#allocation2 + $0x4d8] sm:$0xff]
    %v251 = vld [vmem:[#allocation2 + $0x4e0] sm:$0xff]
    %v252 = vld [vmem:[#allocation2 + $0x4e8] sm:$0xff]
    %v253 = vld [vmem:[#allocation2 + $0x4f0] sm:$0xff]
    %v254 = vld [vmem:[#allocation2 + $0x4f8] sm:$0xff]
    %v255 = vld [vmem:[%s6] sm:$0xf]
    %v257 = vperm.slane %v255, 0
    %v258 = vperm.slane %v255, 1
    %v259 = vperm.slane %v255, 2
    %v260 = vperm.slane %v255, 3
    %v271 = vunpack.c.l.b16 %v89
    %v272 = vunpack.c.h.b16 %v89
    %v273 = vunpack.c.l.b16 %v90
    %v274 = vunpack.c.h.b16 %v90
    %v275 = vunpack.c.l.b16 %v91
    %v276 = vunpack.c.l.b16 %v92
    %v277 = vunpack.c.h.b16 %v92
    %v278 = vunpack.c.l.b16 %v93
    %v279 = vunpack.c.h.b16 %v93
    %v280 = vunpack.c.l.b16 %v94
    %v281 = vpack.c.b16 %v276, %v271
    %v282 = vpack.c.b16 %v277, %v272
    %v283 = vpack.c.b16 %v278, %v273
    %v284 = vpack.c.b16 %v279, %v274
    %v285 = vpack.c.b16 %v280, %v275
    %v451 = vunpack.c.l.b16 %v95
    %v452 = vunpack.c.h.b16 %v95
    %v453 = vunpack.c.l.b16 %v96
    %v454 = vunpack.c.h.b16 %v96
    %v455 = vunpack.c.l.b16 %v97
    %v456 = vunpack.c.h.b16 %v97
    %v457 = vunpack.c.l.b16 %v98
    %v458 = vunpack.c.h.b16 %v98
    %v459 = vunpack.c.l.b16 %v99
    %v460 = vunpack.c.h.b16 %v99
    %v461 = vunpack.c.l.b16 %v100
    %v462 = vunpack.c.h.b16 %v100
    %v463 = vunpack.c.l.b16 %v101
    %v464 = vunpack.c.h.b16 %v101
    %v465 = vunpack.c.l.b16 %v102
    %v466 = vunpack.c.h.b16 %v102
    %v467 = vunpack.c.l.b16 %v103
    %v468 = vunpack.c.h.b16 %v103
    %v469 = vunpack.c.l.b16 %v104
    %v470 = vunpack.c.h.b16 %v104
    %v471 = vunpack.c.l.b16 %v105
    %v472 = vunpack.c.h.b16 %v105
    %v473 = vunpack.c.l.b16 %v106
    %v474 = vunpack.c.h.b16 %v106
    %v475 = vunpack.c.l.b16 %v107
    %v476 = vunpack.c.h.b16 %v107
    %v477 = vunpack.c.l.b16 %v108
    %v478 = vunpack.c.h.b16 %v108
    %v479 = vunpack.c.l.b16 %v109
    %v480 = vunpack.c.h.b16 %v109
    %v481 = vunpack.c.l.b16 %v110
    %v482 = vunpack.c.h.b16 %v110
    %v483 = vunpack.c.l.b16 %v111
    %v484 = vunpack.c.h.b16 %v111
    %v485 = vunpack.c.l.b16 %v112
    %v486 = vunpack.c.h.b16 %v112
    %v487 = vunpack.c.l.b16 %v113
    %v488 = vunpack.c.h.b16 %v113
    %v489 = vunpack.c.l.b16 %v114
    %v490 = vunpack.c.h.b16 %v114
    %v491 = vunpack.c.l.b16 %v115
    %v492 = vunpack.c.h.b16 %v115
    %v493 = vunpack.c.l.b16 %v116
    %v494 = vunpack.c.h.b16 %v116
    %v495 = vunpack.c.l.b16 %v117
    %v496 = vunpack.c.h.b16 %v117
    %v497 = vunpack.c.l.b16 %v118
    %v498 = vunpack.c.h.b16 %v118
    %v499 = vunpack.c.l.b16 %v119
    %v500 = vunpack.c.h.b16 %v119
    %v501 = vunpack.c.l.b16 %v120
    %v502 = vunpack.c.h.b16 %v120
    %v503 = vunpack.c.l.b16 %v121
    %v504 = vunpack.c.h.b16 %v121
    %v505 = vunpack.c.l.b16 %v122
    %v506 = vunpack.c.h.b16 %v122
    %v507 = vunpack.c.l.b16 %v123
    %v508 = vunpack.c.h.b16 %v123
    %v509 = vunpack.c.l.b16 %v124
    %v510 = vunpack.c.h.b16 %v124
    %v511 = vunpack.c.l.b16 %v125
    %v512 = vunpack.c.h.b16 %v125
    %v513 = vunpack.c.l.b16 %v126
    %v514 = vunpack.c.h.b16 %v126
    %v515 = vunpack.c.l.b16 %v127
    %v516 = vunpack.c.h.b16 %v127
    %v517 = vunpack.c.l.b16 %v128
    %v518 = vunpack.c.h.b16 %v128
    %v519 = vunpack.c.l.b16 %v129
    %v520 = vunpack.c.h.b16 %v129
    %v521 = vunpack.c.l.b16 %v130
    %v522 = vunpack.c.h.b16 %v130
    %v523 = vunpack.c.l.b16 %v131
    %v524 = vunpack.c.h.b16 %v131
    %v525 = vunpack.c.l.b16 %v132
    %v526 = vunpack.c.h.b16 %v132
    %v527 = vunpack.c.l.b16 %v133
    %v528 = vunpack.c.h.b16 %v133
    %v529 = vunpack.c.l.b16 %v134
    %v530 = vunpack.c.h.b16 %v134
    %v531 = vunpack.c.l.b16 %v135
    %v532 = vunpack.c.h.b16 %v135
    %v533 = vunpack.c.l.b16 %v136
    %v534 = vunpack.c.h.b16 %v136
    %v535 = vunpack.c.l.b16 %v137
    %v536 = vunpack.c.h.b16 %v137
    %v537 = vunpack.c.l.b16 %v138
    %v538 = vunpack.c.h.b16 %v138
    %v539 = vunpack.c.l.b16 %v139
    %v540 = vunpack.c.h.b16 %v139
    %v541 = vunpack.c.l.b16 %v140
    %v542 = vunpack.c.h.b16 %v140
    %v543 = vunpack.c.l.b16 %v141
    %v544 = vunpack.c.h.b16 %v141
    %v545 = vunpack.c.l.b16 %v142
    %v546 = vunpack.c.h.b16 %v142
    %v547 = vunpack.c.l.b16 %v143
    %v548 = vunpack.c.h.b16 %v143
    %v549 = vunpack.c.l.b16 %v144
    %v550 = vunpack.c.h.b16 %v144
    %v551 = vunpack.c.l.b16 %v145
    %v552 = vunpack.c.h.b16 %v145
    %v553 = vunpack.c.l.b16 %v146
    %v554 = vunpack.c.h.b16 %v146
    %v555 = vunpack.c.l.b16 %v147
    %v556 = vunpack.c.h.b16 %v147
    %v557 = vunpack.c.l.b16 %v148
    %v558 = vunpack.c.h.b16 %v148
    %v559 = vunpack.c.l.b16 %v149
    %v560 = vunpack.c.h.b16 %v149
    %v561 = vunpack.c.l.b16 %v150
    %v562 = vunpack.c.h.b16 %v150
    %v563 = vunpack.c.l.b16 %v151
    %v564 = vunpack.c.h.b16 %v151
    %v565 = vunpack.c.l.b16 %v152
    %v566 = vunpack.c.h.b16 %v152
    %v567 = vunpack.c.l.b16 %v153
    %v568 = vunpack.c.h.b16 %v153
    %v569 = vunpack.c.l.b16 %v154
    %v570 = vunpack.c.h.b16 %v154
    %v571 = vunpack.c.l.b16 %v155
    %v572 = vunpack.c.h.b16 %v155
    %v573 = vunpack.c.l.b16 %v156
    %v574 = vunpack.c.h.b16 %v156
    %v575 = vunpack.c.l.b16 %v157
    %v576 = vunpack.c.h.b16 %v157
    %v577 = vunpack.c.l.b16 %v158
    %v578 = vunpack.c.h.b16 %v158
    %v579 = vunpack.c.l.b16 %v159
    %v580 = vunpack.c.h.b16 %v159
    %v581 = vunpack.c.l.b16 %v160
    %v582 = vunpack.c.h.b16 %v160
    %v583 = vunpack.c.l.b16 %v161
    %v584 = vunpack.c.h.b16 %v161
    %v585 = vunpack.c.l.b16 %v162
    %v586 = vunpack.c.h.b16 %v162
    %v587 = vunpack.c.l.b16 %v163
    %v588 = vunpack.c.h.b16 %v163
    %v589 = vunpack.c.l.b16 %v164
    %v590 = vunpack.c.h.b16 %v164
    %v591 = vunpack.c.l.b16 %v165
    %v592 = vunpack.c.h.b16 %v165
    %v593 = vunpack.c.l.b16 %v166
    %v594 = vunpack.c.h.b16 %v166
    %v595 = vunpack.c.l.b16 %v167
    %v596 = vunpack.c.h.b16 %v167
    %v597 = vunpack.c.l.b16 %v168
    %v598 = vunpack.c.h.b16 %v168
    %v599 = vunpack.c.l.b16 %v169
    %v600 = vunpack.c.h.b16 %v169
    %v601 = vunpack.c.l.b16 %v170
    %v602 = vunpack.c.h.b16 %v170
    %v603 = vunpack.c.l.b16 %v171
    %v604 = vunpack.c.h.b16 %v171
    %v605 = vunpack.c.l.b16 %v172
    %v606 = vunpack.c.h.b16 %v172
    %v607 = vunpack.c.l.b16 %v173
    %v608 = vunpack.c.h.b16 %v173
    %v609 = vunpack.c.l.b16 %v174
    %v610 = vunpack.c.h.b16 %v174
    %v611 = vunpack.c.l.b16 %v175
    %v612 = vunpack.c.h.b16 %v175
    %v613 = vunpack.c.l.b16 %v176
    %v614 = vunpack.c.h.b16 %v176
    %v615 = vunpack.c.l.b16 %v177
    %v616 = vunpack.c.h.b16 %v177
    %v617 = vunpack.c.l.b16 %v178
    %v618 = vunpack.c.h.b16 %v178
    %v619 = vunpack.c.l.b16 %v179
    %v620 = vunpack.c.h.b16 %v179
    %v621 = vunpack.c.l.b16 %v180
    %v622 = vunpack.c.h.b16 %v180
    %v623 = vunpack.c.l.b16 %v181
    %v624 = vunpack.c.h.b16 %v181
    %v625 = vunpack.c.l.b16 %v182
    %v626 = vunpack.c.h.b16 %v182
    %v627 = vunpack.c.l.b16 %v183
    %v628 = vunpack.c.h.b16 %v183
    %v629 = vunpack.c.l.b16 %v184
    %v630 = vunpack.c.h.b16 %v184
    %v631 = vunpack.c.l.b16 %v185
    %v632 = vunpack.c.h.b16 %v185
    %v633 = vunpack.c.l.b16 %v186
    %v634 = vunpack.c.h.b16 %v186
    %v635 = vunpack.c.l.b16 %v187
    %v636 = vunpack.c.h.b16 %v187
    %v637 = vunpack.c.l.b16 %v188
    %v638 = vunpack.c.h.b16 %v188
    %v639 = vunpack.c.l.b16 %v189
    %v640 = vunpack.c.h.b16 %v189
    %v641 = vunpack.c.l.b16 %v190
    %v642 = vunpack.c.h.b16 %v190
    %v643 = vunpack.c.l.b16 %v191
    %v644 = vunpack.c.h.b16 %v191
    %v645 = vunpack.c.l.b16 %v192
    %v646 = vunpack.c.h.b16 %v192
    %v647 = vunpack.c.l.b16 %v193
    %v648 = vunpack.c.h.b16 %v193
    %v649 = vunpack.c.l.b16 %v194
    %v650 = vunpack.c.h.b16 %v194
    %v651 = vunpack.c.l.b16 %v195
    %v652 = vunpack.c.h.b16 %v195
    %v653 = vunpack.c.l.b16 %v196
    %v654 = vunpack.c.h.b16 %v196
    %v655 = vunpack.c.l.b16 %v197
    %v656 = vunpack.c.h.b16 %v197
    %v657 = vunpack.c.l.b16 %v198
    %v658 = vunpack.c.h.b16 %v198
    %v659 = vunpack.c.l.b16 %v199
    %v660 = vunpack.c.h.b16 %v199
    %v661 = vunpack.c.l.b16 %v200
    %v662 = vunpack.c.h.b16 %v200
    %v663 = vunpack.c.l.b16 %v201
    %v664 = vunpack.c.h.b16 %v201
    %v665 = vunpack.c.l.b16 %v202
    %v666 = vunpack.c.h.b16 %v202
    %v667 = vunpack.c.l.b16 %v203
    %v668 = vunpack.c.h.b16 %v203
    %v669 = vunpack.c.l.b16 %v204
    %v670 = vunpack.c.h.b16 %v204
    %v671 = vunpack.c.l.b16 %v205
    %v672 = vunpack.c.h.b16 %v205
    %v673 = vunpack.c.l.b16 %v206
    %v674 = vunpack.c.h.b16 %v206
    %v675 = vunpack.c.l.b16 %v207
    %v676 = vunpack.c.h.b16 %v207
    %v677 = vunpack.c.l.b16 %v208
    %v678 = vunpack.c.h.b16 %v208
    %v679 = vunpack.c.l.b16 %v209
    %v680 = vunpack.c.h.b16 %v209
    %v681 = vunpack.c.l.b16 %v210
    %v682 = vunpack.c.h.b16 %v210
    %v683 = vunpack.c.l.b16 %v211
    %v684 = vunpack.c.h.b16 %v211
    %v685 = vunpack.c.l.b16 %v212
    %v686 = vunpack.c.h.b16 %v212
    %v687 = vunpack.c.l.b16 %v213
    %v688 = vunpack.c.h.b16 %v213
    %v689 = vunpack.c.l.b16 %v214
    %v690 = vunpack.c.h.b16 %v214
    %v691 = vunpack.c.l.b16 %v215
    %v692 = vunpack.c.h.b16 %v215
    %v693 = vunpack.c.l.b16 %v216
    %v694 = vunpack.c.h.b16 %v216
    %v695 = vunpack.c.l.b16 %v217
    %v696 = vunpack.c.h.b16 %v217
    %v697 = vunpack.c.l.b16 %v218
    %v698 = vunpack.c.h.b16 %v218
    %v699 = vunpack.c.l.b16 %v219
    %v700 = vunpack.c.h.b16 %v219
    %v701 = vunpack.c.l.b16 %v220
    %v702 = vunpack.c.h.b16 %v220
    %v703 = vunpack.c.l.b16 %v221
    %v704 = vunpack.c.h.b16 %v221
    %v705 = vunpack.c.l.b16 %v222
    %v706 = vunpack.c.h.b16 %v222
    %v707 = vunpack.c.l.b16 %v223
    %v708 = vunpack.c.h.b16 %v223
    %v709 = vunpack.c.l.b16 %v224
    %v710 = vunpack.c.h.b16 %v224
    %v711 = vunpack.c.l.b16 %v225
    %v712 = vunpack.c.h.b16 %v225
    %v713 = vunpack.c.l.b16 %v226
    %v714 = vunpack.c.h.b16 %v226
    %v715 = vunpack.c.l.b16 %v227
    %v716 = vunpack.c.h.b16 %v227
    %v717 = vunpack.c.l.b16 %v228
    %v718 = vunpack.c.h.b16 %v228
    %v719 = vunpack.c.l.b16 %v229
    %v720 = vunpack.c.h.b16 %v229
    %v721 = vunpack.c.l.b16 %v230
    %v722 = vunpack.c.h.b16 %v230
    %v723 = vunpack.c.l.b16 %v231
    %v724 = vunpack.c.h.b16 %v231
    %v725 = vunpack.c.l.b16 %v232
    %v726 = vunpack.c.h.b16 %v232
    %v727 = vunpack.c.l.b16 %v233
    %v728 = vunpack.c.h.b16 %v233
    %v729 = vunpack.c.l.b16 %v234
    %v730 = vunpack.c.h.b16 %v234
    %v731 = vunpack.c.l.b16 %v235
    %v732 = vunpack.c.h.b16 %v235
    %v733 = vunpack.c.l.b16 %v236
    %v734 = vunpack.c.h.b16 %v236
    %v735 = vunpack.c.l.b16 %v237
    %v736 = vunpack.c.h.b16 %v237
    %v737 = vunpack.c.l.b16 %v238
    %v738 = vunpack.c.h.b16 %v238
    %v739 = vunpack.c.l.b16 %v239
    %v740 = vunpack.c.h.b16 %v239
    %v741 = vunpack.c.l.b16 %v240
    %v742 = vunpack.c.h.b16 %v240
    %v743 = vunpack.c.l.b16 %v241
    %v744 = vunpack.c.h.b16 %v241
    %v745 = vunpack.c.l.b16 %v242
    %v746 = vunpack.c.h.b16 %v242
    %v747 = vunpack.c.l.b16 %v243
    %v748 = vunpack.c.h.b16 %v243
    %v749 = vunpack.c.l.b16 %v244
    %v750 = vunpack.c.h.b16 %v244
    %v751 = vunpack.c.l.b16 %v245
    %v752 = vunpack.c.h.b16 %v245
    %v753 = vunpack.c.l.b16 %v246
    %v754 = vunpack.c.h.b16 %v246
    %v755 = vunpack.c.l.b16 %v247
    %v756 = vunpack.c.h.b16 %v247
    %v757 = vunpack.c.l.b16 %v248
    %v758 = vunpack.c.h.b16 %v248
    %v759 = vunpack.c.l.b16 %v249
    %v760 = vunpack.c.h.b16 %v249
    %v761 = vunpack.c.l.b16 %v250
    %v762 = vunpack.c.h.b16 %v250
    %v763 = vunpack.c.l.b16 %v251
    %v764 = vunpack.c.h.b16 %v251
    %v765 = vunpack.c.l.b16 %v252
    %v766 = vunpack.c.h.b16 %v252
    %v767 = vunpack.c.l.b16 %v253
    %v768 = vunpack.c.h.b16 %v253
    %v769 = vunpack.c.l.b16 %v254
    %v770 = vunpack.c.h.b16 %v254
    %v771 = vpack.c.b16 %v455, %v451
    %v772 = vpack.c.b16 %v456, %v452
    %v773 = vpack.c.b16 %v457, %v453
    %v774 = vpack.c.b16 %v458, %v454
    %v775 = vpack.c.b16 %v463, %v459
    %v776 = vpack.c.b16 %v464, %v460
    %v777 = vpack.c.b16 %v465, %v461
    %v778 = vpack.c.b16 %v466, %v462
    %v779 = vpack.c.b16 %v471, %v467
    %v780 = vpack.c.b16 %v472, %v468
    %v781 = vpack.c.b16 %v473, %v469
    %v782 = vpack.c.b16 %v474, %v470
    %v783 = vpack.c.b16 %v479, %v475
    %v784 = vpack.c.b16 %v480, %v476
    %v785 = vpack.c.b16 %v481, %v477
    %v786 = vpack.c.b16 %v482, %v478
    %v787 = vpack.c.b16 %v487, %v483
    %v788 = vpack.c.b16 %v488, %v484
    %v789 = vpack.c.b16 %v489, %v485
    %v790 = vpack.c.b16 %v490, %v486
    %v791 = vpack.c.b16 %v495, %v491
    %v792 = vpack.c.b16 %v496, %v492
    %v793 = vpack.c.b16 %v497, %v493
    %v794 = vpack.c.b16 %v498, %v494
    %v795 = vpack.c.b16 %v503, %v499
    %v796 = vpack.c.b16 %v504, %v500
    %v797 = vpack.c.b16 %v505, %v501
    %v798 = vpack.c.b16 %v506, %v502
    %v799 = vpack.c.b16 %v511, %v507
    %v800 = vpack.c.b16 %v512, %v508
    %v801 = vpack.c.b16 %v513, %v509
    %v802 = vpack.c.b16 %v514, %v510
    %v803 = vpack.c.b16 %v519, %v515
    %v804 = vpack.c.b16 %v520, %v516
    %v805 = vpack.c.b16 %v521, %v517
    %v806 = vpack.c.b16 %v522, %v518
    %v807 = vpack.c.b16 %v527, %v523
    %v808 = vpack.c.b16 %v528, %v524
    %v809 = vpack.c.b16 %v529, %v525
    %v810 = vpack.c.b16 %v530, %v526
    %v811 = vpack.c.b16 %v535, %v531
    %v812 = vpack.c.b16 %v536, %v532
    %v813 = vpack.c.b16 %v537, %v533
    %v814 = vpack.c.b16 %v538, %v534
    %v815 = vpack.c.b16 %v543, %v539
    %v816 = vpack.c.b16 %v544, %v540
    %v817 = vpack.c.b16 %v545, %v541
    %v818 = vpack.c.b16 %v546, %v542
    %v819 = vpack.c.b16 %v551, %v547
    %v820 = vpack.c.b16 %v552, %v548
    %v821 = vpack.c.b16 %v553, %v549
    %v822 = vpack.c.b16 %v554, %v550
    %v823 = vpack.c.b16 %v559, %v555
    %v824 = vpack.c.b16 %v560, %v556
    %v825 = vpack.c.b16 %v561, %v557
    %v826 = vpack.c.b16 %v562, %v558
    %v827 = vpack.c.b16 %v567, %v563
    %v828 = vpack.c.b16 %v568, %v564
    %v829 = vpack.c.b16 %v569, %v565
    %v830 = vpack.c.b16 %v570, %v566
    %v831 = vpack.c.b16 %v575, %v571
    %v832 = vpack.c.b16 %v576, %v572
    %v833 = vpack.c.b16 %v577, %v573
    %v834 = vpack.c.b16 %v578, %v574
    %v835 = vpack.c.b16 %v583, %v579
    %v836 = vpack.c.b16 %v584, %v580
    %v837 = vpack.c.b16 %v585, %v581
    %v838 = vpack.c.b16 %v586, %v582
    %v839 = vpack.c.b16 %v591, %v587
    %v840 = vpack.c.b16 %v592, %v588
    %v841 = vpack.c.b16 %v593, %v589
    %v842 = vpack.c.b16 %v594, %v590
    %v843 = vpack.c.b16 %v599, %v595
    %v844 = vpack.c.b16 %v600, %v596
    %v845 = vpack.c.b16 %v601, %v597
    %v846 = vpack.c.b16 %v602, %v598
    %v847 = vpack.c.b16 %v607, %v603
    %v848 = vpack.c.b16 %v608, %v604
    %v849 = vpack.c.b16 %v609, %v605
    %v850 = vpack.c.b16 %v610, %v606
    %v851 = vpack.c.b16 %v615, %v611
    %v852 = vpack.c.b16 %v616, %v612
    %v853 = vpack.c.b16 %v617, %v613
    %v854 = vpack.c.b16 %v618, %v614
    %v855 = vpack.c.b16 %v623, %v619
    %v856 = vpack.c.b16 %v624, %v620
    %v857 = vpack.c.b16 %v625, %v621
    %v858 = vpack.c.b16 %v626, %v622
    %v859 = vpack.c.b16 %v631, %v627
    %v860 = vpack.c.b16 %v632, %v628
    %v861 = vpack.c.b16 %v633, %v629
    %v862 = vpack.c.b16 %v634, %v630
    %v863 = vpack.c.b16 %v639, %v635
    %v864 = vpack.c.b16 %v640, %v636
    %v865 = vpack.c.b16 %v641, %v637
    %v866 = vpack.c.b16 %v642, %v638
    %v867 = vpack.c.b16 %v647, %v643
    %v868 = vpack.c.b16 %v648, %v644
    %v869 = vpack.c.b16 %v649, %v645
    %v870 = vpack.c.b16 %v650, %v646
    %v871 = vpack.c.b16 %v655, %v651
    %v872 = vpack.c.b16 %v656, %v652
    %v873 = vpack.c.b16 %v657, %v653
    %v874 = vpack.c.b16 %v658, %v654
    %v875 = vpack.c.b16 %v663, %v659
    %v876 = vpack.c.b16 %v664, %v660
    %v877 = vpack.c.b16 %v665, %v661
    %v878 = vpack.c.b16 %v666, %v662
    %v879 = vpack.c.b16 %v671, %v667
    %v880 = vpack.c.b16 %v672, %v668
    %v881 = vpack.c.b16 %v673, %v669
    %v882 = vpack.c.b16 %v674, %v670
    %v883 = vpack.c.b16 %v679, %v675
    %v884 = vpack.c.b16 %v680, %v676
    %v885 = vpack.c.b16 %v681, %v677
    %v886 = vpack.c.b16 %v682, %v678
    %v887 = vpack.c.b16 %v687, %v683
    %v888 = vpack.c.b16 %v688, %v684
    %v889 = vpack.c.b16 %v689, %v685
    %v890 = vpack.c.b16 %v690, %v686
    %v891 = vpack.c.b16 %v695, %v691
    %v892 = vpack.c.b16 %v696, %v692
    %v893 = vpack.c.b16 %v697, %v693
    %v894 = vpack.c.b16 %v698, %v694
    %v895 = vpack.c.b16 %v703, %v699
    %v896 = vpack.c.b16 %v704, %v700
    %v897 = vpack.c.b16 %v705, %v701
    %v898 = vpack.c.b16 %v706, %v702
    %v899 = vpack.c.b16 %v711, %v707
    %v900 = vpack.c.b16 %v712, %v708
    %v901 = vpack.c.b16 %v713, %v709
    %v902 = vpack.c.b16 %v714, %v710
    %v903 = vpack.c.b16 %v719, %v715
    %v904 = vpack.c.b16 %v720, %v716
    %v905 = vpack.c.b16 %v721, %v717
    %v906 = vpack.c.b16 %v722, %v718
    %v907 = vpack.c.b16 %v727, %v723
    %v908 = vpack.c.b16 %v728, %v724
    %v909 = vpack.c.b16 %v729, %v725
    %v910 = vpack.c.b16 %v730, %v726
    %v911 = vpack.c.b16 %v735, %v731
    %v912 = vpack.c.b16 %v736, %v732
    %v913 = vpack.c.b16 %v737, %v733
    %v914 = vpack.c.b16 %v738, %v734
    %v915 = vpack.c.b16 %v743, %v739
    %v916 = vpack.c.b16 %v744, %v740
    %v917 = vpack.c.b16 %v745, %v741
    %v918 = vpack.c.b16 %v746, %v742
    %v919 = vpack.c.b16 %v751, %v747
    %v920 = vpack.c.b16 %v752, %v748
    %v921 = vpack.c.b16 %v753, %v749
    %v922 = vpack.c.b16 %v754, %v750
    %v923 = vpack.c.b16 %v759, %v755
    %v924 = vpack.c.b16 %v760, %v756
    %v925 = vpack.c.b16 %v761, %v757
    %v926 = vpack.c.b16 %v762, %v758
    %v927 = vpack.c.b16 %v767, %v763
    %v928 = vpack.c.b16 %v768, %v764
    %v929 = vpack.c.b16 %v769, %v765
    %v930 = vpack.c.b16 %v770, %v766
    %1091 = vmatpush.bf16.msra.mxu0 %v799
    %1092 = vmatpush.bf16.msra.mxu0 %v795
    %1093 = vmatpush.bf16.msra.mxu0 %v791
    %1094 = vmatpush.bf16.msra.mxu0 %v787
    %1095 = vmatpush.bf16.msra.mxu0 %v783
    %1096 = vmatpush.bf16.msra.mxu0 %v779
    %1097 = vmatpush.bf16.msra.mxu0 %v775
    %1098 = vmatpush.bf16.msra.mxu0 %v771
    %1099 = vmatmul.bf16.gmra.mxu0 %v281
    %v1100 = vpop.f32.mrf.mxu0
    %v1101 = vadd.f32 %v257, %v1100
    %v1102 = vpop.f32.mrf.mxu0
    %v1103 = vadd.f32 %v257, %v1102
    %1104 = vdwg.mxu0
    %1105 = vmatpush.bf16.msra.mxu0 %v831
    %1106 = vmatpush.bf16.msra.mxu0 %v827
    %1107 = vmatpush.bf16.msra.mxu0 %v823
    %1108 = vmatpush.bf16.msra.mxu0 %v819
    %1109 = vmatpush.bf16.msra.mxu0 %v815
    %1110 = vmatpush.bf16.msra.mxu0 %v811
    %1111 = vmatpush.bf16.msra.mxu0 %v807
    %1112 = vmatpush.bf16.msra.mxu0 %v803
    %1113 = vmatmul.bf16.gmra.mxu0 %v282
    %v1114 = vpop.f32.mrf.mxu0
    %v1115 = vadd.f32 %v1101, %v1114
    %v1116 = vpop.f32.mrf.mxu0
    %v1117 = vadd.f32 %v1103, %v1116
    %1118 = vdwg.mxu0
    %1119 = vmatpush.bf16.msra.mxu0 %v863
    %1120 = vmatpush.bf16.msra.mxu0 %v859
    %1121 = vmatpush.bf16.msra.mxu0 %v855
    %1122 = vmatpush.bf16.msra.mxu0 %v851
    %1123 = vmatpush.bf16.msra.mxu0 %v847
    %1124 = vmatpush.bf16.msra.mxu0 %v843
    %1125 = vmatpush.bf16.msra.mxu0 %v839
    %1126 = vmatpush.bf16.msra.mxu0 %v835
    %1127 = vmatmul.bf16.gmra.mxu0 %v283
    %v1128 = vpop.f32.mrf.mxu0
    %v1129 = vadd.f32 %v1115, %v1128
    %v1130 = vpop.f32.mrf.mxu0
    %v1131 = vadd.f32 %v1117, %v1130
    %1132 = vdwg.mxu0
    %1133 = vmatpush.bf16.msra.mxu0 %v895
    %1134 = vmatpush.bf16.msra.mxu0 %v891
    %1135 = vmatpush.bf16.msra.mxu0 %v887
    %1136 = vmatpush.bf16.msra.mxu0 %v883
    %1137 = vmatpush.bf16.msra.mxu0 %v879
    %1138 = vmatpush.bf16.msra.mxu0 %v875
    %1139 = vmatpush.bf16.msra.mxu0 %v871
    %1140 = vmatpush.bf16.msra.mxu0 %v867
    %1141 = vmatmul.bf16.gmra.mxu0 %v284
    %v1142 = vpop.f32.mrf.mxu0
    %v1143 = vadd.f32 %v1129, %v1142
    %v1144 = vpop.f32.mrf.mxu0
    %v1145 = vadd.f32 %v1131, %v1144
    %1146 = vdwg.mxu0
    %1147 = vmatpush.bf16.msra.mxu0 %v927
    %1148 = vmatpush.bf16.msra.mxu0 %v923
    %1149 = vmatpush.bf16.msra.mxu0 %v919
    %1150 = vmatpush.bf16.msra.mxu0 %v915
    %1151 = vmatpush.bf16.msra.mxu0 %v911
    %1152 = vmatpush.bf16.msra.mxu0 %v907
    %1153 = vmatpush.bf16.msra.mxu0 %v903
    %1154 = vmatpush.bf16.msra.mxu0 %v899
    %1155 = vmatmul.bf16.gmra.mxu0 %v285
    %v1156 = vpop.f32.mrf.mxu0
    %v1157 = vadd.f32 %v1143, %v1156
    %v1158 = vpop.f32.mrf.mxu0
    %v1159 = vadd.f32 %v1145, %v1158
    %1160 = vdwg.mxu0
    %1161 = vmatpush.bf16.msra.mxu0 %v800
    %1162 = vmatpush.bf16.msra.mxu0 %v796
    %1163 = vmatpush.bf16.msra.mxu0 %v792
    %1164 = vmatpush.bf16.msra.mxu0 %v788
    %1165 = vmatpush.bf16.msra.mxu0 %v784
    %1166 = vmatpush.bf16.msra.mxu0 %v780
    %1167 = vmatpush.bf16.msra.mxu0 %v776
    %1168 = vmatpush.bf16.msra.mxu0 %v772
    %1169 = vmatmul.bf16.gmra.mxu0 %v281
    %v1170 = vpop.f32.mrf.mxu0
    %v1171 = vadd.f32 %v258, %v1170
    %v1172 = vpop.f32.mrf.mxu0
    %v1173 = vadd.f32 %v258, %v1172
    %1174 = vdwg.mxu0
    %1175 = vmatpush.bf16.msra.mxu0 %v832
    %1176 = vmatpush.bf16.msra.mxu0 %v828
    %1177 = vmatpush.bf16.msra.mxu0 %v824
    %1178 = vmatpush.bf16.msra.mxu0 %v820
    %1179 = vmatpush.bf16.msra.mxu0 %v816
    %1180 = vmatpush.bf16.msra.mxu0 %v812
    %1181 = vmatpush.bf16.msra.mxu0 %v808
    %1182 = vmatpush.bf16.msra.mxu0 %v804
    %1183 = vmatmul.bf16.gmra.mxu0 %v282
    %v1184 = vpop.f32.mrf.mxu0
    %v1185 = vadd.f32 %v1171, %v1184
    %v1186 = vpop.f32.mrf.mxu0
    %v1187 = vadd.f32 %v1173, %v1186
    %1188 = vdwg.mxu0
    %1189 = vmatpush.bf16.msra.mxu0 %v864
    %1190 = vmatpush.bf16.msra.mxu0 %v860
    %1191 = vmatpush.bf16.msra.mxu0 %v856
    %1192 = vmatpush.bf16.msra.mxu0 %v852
    %1193 = vmatpush.bf16.msra.mxu0 %v848
    %1194 = vmatpush.bf16.msra.mxu0 %v844
    %1195 = vmatpush.bf16.msra.mxu0 %v840
    %1196 = vmatpush.bf16.msra.mxu0 %v836
    %1197 = vmatmul.bf16.gmra.mxu0 %v283
    %v1198 = vpop.f32.mrf.mxu0
    %v1199 = vadd.f32 %v1185, %v1198
    %v1200 = vpop.f32.mrf.mxu0
    %v1201 = vadd.f32 %v1187, %v1200
    %1202 = vdwg.mxu0
    %1203 = vmatpush.bf16.msra.mxu0 %v896
    %1204 = vmatpush.bf16.msra.mxu0 %v892
    %1205 = vmatpush.bf16.msra.mxu0 %v888
    %1206 = vmatpush.bf16.msra.mxu0 %v884
    %1207 = vmatpush.bf16.msra.mxu0 %v880
    %1208 = vmatpush.bf16.msra.mxu0 %v876
    %1209 = vmatpush.bf16.msra.mxu0 %v872
    %1210 = vmatpush.bf16.msra.mxu0 %v868
    %1211 = vmatmul.bf16.gmra.mxu0 %v284
    %v1212 = vpop.f32.mrf.mxu0
    %v1213 = vadd.f32 %v1199, %v1212
    %v1214 = vpop.f32.mrf.mxu0
    %v1215 = vadd.f32 %v1201, %v1214
    %1216 = vdwg.mxu0
    %1217 = vmatpush.bf16.msra.mxu0 %v928
    %1218 = vmatpush.bf16.msra.mxu0 %v924
    %1219 = vmatpush.bf16.msra.mxu0 %v920
    %1220 = vmatpush.bf16.msra.mxu0 %v916
    %1221 = vmatpush.bf16.msra.mxu0 %v912
    %1222 = vmatpush.bf16.msra.mxu0 %v908
    %1223 = vmatpush.bf16.msra.mxu0 %v904
    %1224 = vmatpush.bf16.msra.mxu0 %v900
    %1225 = vmatmul.bf16.gmra.mxu0 %v285
    %v1226 = vpop.f32.mrf.mxu0
    %v1227 = vadd.f32 %v1213, %v1226
    %v1228 = vpop.f32.mrf.mxu0
    %v1229 = vadd.f32 %v1215, %v1228
    %1230 = vdwg.mxu0
    %1231 = vmatpush.bf16.msra.mxu0 %v801
    %1232 = vmatpush.bf16.msra.mxu0 %v797
    %1233 = vmatpush.bf16.msra.mxu0 %v793
    %1234 = vmatpush.bf16.msra.mxu0 %v789
    %1235 = vmatpush.bf16.msra.mxu0 %v785
    %1236 = vmatpush.bf16.msra.mxu0 %v781
    %1237 = vmatpush.bf16.msra.mxu0 %v777
    %1238 = vmatpush.bf16.msra.mxu0 %v773
    %1239 = vmatmul.bf16.gmra.mxu0 %v281
    %v1240 = vpop.f32.mrf.mxu0
    %v1241 = vadd.f32 %v259, %v1240
    %v1242 = vpop.f32.mrf.mxu0
    %v1243 = vadd.f32 %v259, %v1242
    %1244 = vdwg.mxu0
    %1245 = vmatpush.bf16.msra.mxu0 %v833
    %1246 = vmatpush.bf16.msra.mxu0 %v829
    %1247 = vmatpush.bf16.msra.mxu0 %v825
    %1248 = vmatpush.bf16.msra.mxu0 %v821
    %1249 = vmatpush.bf16.msra.mxu0 %v817
    %1250 = vmatpush.bf16.msra.mxu0 %v813
    %1251 = vmatpush.bf16.msra.mxu0 %v809
    %1252 = vmatpush.bf16.msra.mxu0 %v805
    %1253 = vmatmul.bf16.gmra.mxu0 %v282
    %v1254 = vpop.f32.mrf.mxu0
    %v1255 = vadd.f32 %v1241, %v1254
    %v1256 = vpop.f32.mrf.mxu0
    %v1257 = vadd.f32 %v1243, %v1256
    %1258 = vdwg.mxu0
    %1259 = vmatpush.bf16.msra.mxu0 %v865
    %1260 = vmatpush.bf16.msra.mxu0 %v861
    %1261 = vmatpush.bf16.msra.mxu0 %v857
    %1262 = vmatpush.bf16.msra.mxu0 %v853
    %1263 = vmatpush.bf16.msra.mxu0 %v849
    %1264 = vmatpush.bf16.msra.mxu0 %v845
    %1265 = vmatpush.bf16.msra.mxu0 %v841
    %1266 = vmatpush.bf16.msra.mxu0 %v837
    %1267 = vmatmul.bf16.gmra.mxu0 %v283
    %v1268 = vpop.f32.mrf.mxu0
    %v1269 = vadd.f32 %v1255, %v1268
    %v1270 = vpop.f32.mrf.mxu0
    %v1271 = vadd.f32 %v1257, %v1270
    %1272 = vdwg.mxu0
    %1273 = vmatpush.bf16.msra.mxu0 %v897
    %1274 = vmatpush.bf16.msra.mxu0 %v893
    %1275 = vmatpush.bf16.msra.mxu0 %v889
    %1276 = vmatpush.bf16.msra.mxu0 %v885
    %1277 = vmatpush.bf16.msra.mxu0 %v881
    %1278 = vmatpush.bf16.msra.mxu0 %v877
    %1279 = vmatpush.bf16.msra.mxu0 %v873
    %1280 = vmatpush.bf16.msra.mxu0 %v869
    %1281 = vmatmul.bf16.gmra.mxu0 %v284
    %v1282 = vpop.f32.mrf.mxu0
    %v1283 = vadd.f32 %v1269, %v1282
    %v1284 = vpop.f32.mrf.mxu0
    %v1285 = vadd.f32 %v1271, %v1284
    %1286 = vdwg.mxu0
    %1287 = vmatpush.bf16.msra.mxu0 %v929
    %1288 = vmatpush.bf16.msra.mxu0 %v925
    %1289 = vmatpush.bf16.msra.mxu0 %v921
    %1290 = vmatpush.bf16.msra.mxu0 %v917
    %1291 = vmatpush.bf16.msra.mxu0 %v913
    %1292 = vmatpush.bf16.msra.mxu0 %v909
    %1293 = vmatpush.bf16.msra.mxu0 %v905
    %1294 = vmatpush.bf16.msra.mxu0 %v901
    %1295 = vmatmul.bf16.gmra.mxu0 %v285
    %v1296 = vpop.f32.mrf.mxu0
    %v1297 = vadd.f32 %v1283, %v1296
    %v1298 = vpop.f32.mrf.mxu0
    %v1299 = vadd.f32 %v1285, %v1298
    %1300 = vdwg.mxu0
    %1301 = vmatpush.bf16.msra.mxu0 %v802
    %1302 = vmatpush.bf16.msra.mxu0 %v798
    %1303 = vmatpush.bf16.msra.mxu0 %v794
    %1304 = vmatpush.bf16.msra.mxu0 %v790
    %1305 = vmatpush.bf16.msra.mxu0 %v786
    %1306 = vmatpush.bf16.msra.mxu0 %v782
    %1307 = vmatpush.bf16.msra.mxu0 %v778
    %1308 = vmatpush.bf16.msra.mxu0 %v774
    %1309 = vmatmul.bf16.gmra.mxu0 %v281
    %v1310 = vpop.f32.mrf.mxu0
    %v1311 = vadd.f32 %v260, %v1310
    %v1312 = vpop.f32.mrf.mxu0
    %v1313 = vadd.f32 %v260, %v1312
    %1314 = vdwg.mxu0
    %1315 = vmatpush.bf16.msra.mxu0 %v834
    %1316 = vmatpush.bf16.msra.mxu0 %v830
    %1317 = vmatpush.bf16.msra.mxu0 %v826
    %1318 = vmatpush.bf16.msra.mxu0 %v822
    %1319 = vmatpush.bf16.msra.mxu0 %v818
    %1320 = vmatpush.bf16.msra.mxu0 %v814
    %1321 = vmatpush.bf16.msra.mxu0 %v810
    %1322 = vmatpush.bf16.msra.mxu0 %v806
    %1323 = vmatmul.bf16.gmra.mxu0 %v282
    %v1324 = vpop.f32.mrf.mxu0
    %v1325 = vadd.f32 %v1311, %v1324
    %v1326 = vpop.f32.mrf.mxu0
    %v1327 = vadd.f32 %v1313, %v1326
    %1328 = vdwg.mxu0
    %1329 = vmatpush.bf16.msra.mxu0 %v866
    %1330 = vmatpush.bf16.msra.mxu0 %v862
    %1331 = vmatpush.bf16.msra.mxu0 %v858
    %1332 = vmatpush.bf16.msra.mxu0 %v854
    %1333 = vmatpush.bf16.msra.mxu0 %v850
    %1334 = vmatpush.bf16.msra.mxu0 %v846
    %1335 = vmatpush.bf16.msra.mxu0 %v842
    %1336 = vmatpush.bf16.msra.mxu0 %v838
    %1337 = vmatmul.bf16.gmra.mxu0 %v283
    %v1338 = vpop.f32.mrf.mxu0
    %v1339 = vadd.f32 %v1325, %v1338
    %v1340 = vpop.f32.mrf.mxu0
    %v1341 = vadd.f32 %v1327, %v1340
    %1342 = vdwg.mxu0
    %1343 = vmatpush.bf16.msra.mxu0 %v898
    %1344 = vmatpush.bf16.msra.mxu0 %v894
    %1345 = vmatpush.bf16.msra.mxu0 %v890
    %1346 = vmatpush.bf16.msra.mxu0 %v886
    %1347 = vmatpush.bf16.msra.mxu0 %v882
    %1348 = vmatpush.bf16.msra.mxu0 %v878
    %1349 = vmatpush.bf16.msra.mxu0 %v874
    %1350 = vmatpush.bf16.msra.mxu0 %v870
    %1351 = vmatmul.bf16.gmra.mxu0 %v284
    %v1352 = vpop.f32.mrf.mxu0
    %v1353 = vadd.f32 %v1339, %v1352
    %v1354 = vpop.f32.mrf.mxu0
    %v1355 = vadd.f32 %v1341, %v1354
    %1356 = vdwg.mxu0
    %1357 = vmatpush.bf16.msra.mxu0 %v930
    %1358 = vmatpush.bf16.msra.mxu0 %v926
    %1359 = vmatpush.bf16.msra.mxu0 %v922
    %1360 = vmatpush.bf16.msra.mxu0 %v918
    %1361 = vmatpush.bf16.msra.mxu0 %v914
    %1362 = vmatpush.bf16.msra.mxu0 %v910
    %1363 = vmatpush.bf16.msra.mxu0 %v906
    %1364 = vmatpush.bf16.msra.mxu0 %v902
    %1365 = vmatmul.bf16.gmra.mxu0 %v285
    %v1366 = vpop.f32.mrf.mxu0
    %v1367 = vadd.f32 %v1353, %v1366
    %v1368 = vpop.f32.mrf.mxu0
    %v1369 = vadd.f32 %v1355, %v1368
    %1370 = vdwg.mxu0
    %v1371 = vmax.f32 %v1157, 0.0
    %v1372 = vmax.f32 %v1227, 0.0
    %v1373 = vmax.f32 %v1297, 0.0
    %v1374 = vmax.f32 %v1367, 0.0
    %v1375 = vmax.f32 %v1159, 0.0
    %v1376 = vmax.f32 %v1229, 0.0
    %v1377 = vmax.f32 %v1299, 0.0
    %v1378 = vmax.f32 %v1369, 0.0
    %v1379 = vpack.c.bf16 %v1375, %v1371
    %v1380 = vpack.c.bf16 %v1376, %v1372
    %v1381 = vpack.c.bf16 %v1377, %v1373
    %v1382 = vpack.c.bf16 %v1378, %v1374
    %v1383 = vld [vmem:[#allocation4] sm:$0xff]
    %v1384 = vld [vmem:[#allocation4 + $0x8] sm:$0xff]
    %v1385 = vld [vmem:[#allocation4 + $0x10] sm:$0xff]
    %v1386 = vld [vmem:[#allocation4 + $0x18] sm:$0xff]
    %v1387 = vld [vmem:[#allocation4 + $0x20] sm:$0xff]
    %v1388 = vld [vmem:[#allocation4 + $0x28] sm:$0xff]
    %v1389 = vld [vmem:[#allocation4 + $0x30] sm:$0xff]
    %v1390 = vld [vmem:[#allocation4 + $0x38] sm:$0xff]
    %v1391 = vld [vmem:[#allocation4 + $0x40] sm:$0xff]
    %v1392 = vld [vmem:[#allocation4 + $0x48] sm:$0xff]
    %v1393 = vld [vmem:[#allocation4 + $0x50] sm:$0xff]
    %v1394 = vld [vmem:[#allocation4 + $0x58] sm:$0xff]
    %v1395 = vld [vmem:[#allocation4 + $0x60] sm:$0xff]
    %v1396 = vld [vmem:[#allocation4 + $0x68] sm:$0xff]
    %v1397 = vld [vmem:[#allocation4 + $0x70] sm:$0xff]
    %v1398 = vld [vmem:[#allocation4 + $0x78] sm:$0xff]
    %v1399 = vld [vmem:[#allocation4 + $0x80] sm:$0xff]
    %v1400 = vld [vmem:[#allocation4 + $0x88] sm:$0xff]
    %v1401 = vld [vmem:[#allocation4 + $0x90] sm:$0xff]
    %v1402 = vld [vmem:[#allocation4 + $0x98] sm:$0xff]
    %v1403 = vld [vmem:[#allocation4 + $0xa0] sm:$0xff]
    %v1404 = vld [vmem:[#allocation4 + $0xa8] sm:$0xff]
    %v1405 = vld [vmem:[#allocation4 + $0xb0] sm:$0xff]
    %v1406 = vld [vmem:[#allocation4 + $0xb8] sm:$0xff]
    %v1407 = vld [vmem:[#allocation4 + $0xc0] sm:$0xff]
    %v1408 = vld [vmem:[#allocation4 + $0xc8] sm:$0xff]
    %v1409 = vld [vmem:[#allocation4 + $0xd0] sm:$0xff]
    %v1410 = vld [vmem:[#allocation4 + $0xd8] sm:$0xff]
    %v1411 = vld [vmem:[#allocation4 + $0xe0] sm:$0xff]
    %v1412 = vld [vmem:[#allocation4 + $0xe8] sm:$0xff]
    %v1413 = vld [vmem:[#allocation4 + $0xf0] sm:$0xff]
    %v1414 = vld [vmem:[#allocation4 + $0xf8] sm:$0xff]
    %v1415 = vld [vmem:[#allocation4 + $0x100] sm:$0xff]
    %v1416 = vld [vmem:[#allocation4 + $0x108] sm:$0xff]
    %v1417 = vld [vmem:[#allocation4 + $0x110] sm:$0xff]
    %v1418 = vld [vmem:[#allocation4 + $0x118] sm:$0xff]
    %v1419 = vld [vmem:[#allocation4 + $0x120] sm:$0xff]
    %v1420 = vld [vmem:[#allocation4 + $0x128] sm:$0xff]
    %v1421 = vld [vmem:[#allocation4 + $0x130] sm:$0xff]
    %v1422 = vld [vmem:[#allocation4 + $0x138] sm:$0xff]
    %v1423 = vld [vmem:[#allocation4 + $0x140] sm:$0xff]
    %v1424 = vld [vmem:[#allocation4 + $0x148] sm:$0xff]
    %v1425 = vld [vmem:[#allocation4 + $0x150] sm:$0xff]
    %v1426 = vld [vmem:[#allocation4 + $0x158] sm:$0xff]
    %v1427 = vld [vmem:[#allocation4 + $0x160] sm:$0xff]
    %v1428 = vld [vmem:[#allocation4 + $0x168] sm:$0xff]
    %v1429 = vld [vmem:[#allocation4 + $0x170] sm:$0xff]
    %v1430 = vld [vmem:[#allocation4 + $0x178] sm:$0xff]
    %v1431 = vld [vmem:[#allocation4 + $0x180] sm:$0xff]
    %v1432 = vld [vmem:[#allocation4 + $0x188] sm:$0xff]
    %v1433 = vld [vmem:[#allocation4 + $0x190] sm:$0xff]
    %v1434 = vld [vmem:[#allocation4 + $0x198] sm:$0xff]
    %v1435 = vld [vmem:[#allocation4 + $0x1a0] sm:$0xff]
    %v1436 = vld [vmem:[#allocation4 + $0x1a8] sm:$0xff]
    %v1437 = vld [vmem:[#allocation4 + $0x1b0] sm:$0xff]
    %v1438 = vld [vmem:[#allocation4 + $0x1b8] sm:$0xff]
    %v1439 = vld [vmem:[#allocation4 + $0x1c0] sm:$0xff]
    %v1440 = vld [vmem:[#allocation4 + $0x1c8] sm:$0xff]
    %v1441 = vld [vmem:[#allocation4 + $0x1d0] sm:$0xff]
    %v1442 = vld [vmem:[#allocation4 + $0x1d8] sm:$0xff]
    %v1443 = vld [vmem:[#allocation4 + $0x1e0] sm:$0xff]
    %v1444 = vld [vmem:[#allocation4 + $0x1e8] sm:$0xff]
    %v1445 = vld [vmem:[#allocation4 + $0x1f0] sm:$0xff]
    %v1446 = vld [vmem:[#allocation4 + $0x1f8] sm:$0xff]
    %v1447 = vld [vmem:[%s6 + $0x4] sm:$0x3]
    %v1449 = vperm.slane %v1447, 0
    %v1450 = vperm.slane %v1447, 1
    %v1517 = vunpack.c.l.b16 %v1383
    %v1518 = vunpack.c.h.b16 %v1383
    %v1519 = vunpack.c.l.b16 %v1384
    %v1520 = vunpack.c.h.b16 %v1384
    %v1521 = vunpack.c.l.b16 %v1385
    %v1522 = vunpack.c.h.b16 %v1385
    %v1523 = vunpack.c.l.b16 %v1386
    %v1524 = vunpack.c.h.b16 %v1386
    %v1525 = vunpack.c.l.b16 %v1387
    %v1526 = vunpack.c.h.b16 %v1387
    %v1527 = vunpack.c.l.b16 %v1388
    %v1528 = vunpack.c.h.b16 %v1388
    %v1529 = vunpack.c.l.b16 %v1389
    %v1530 = vunpack.c.h.b16 %v1389
    %v1531 = vunpack.c.l.b16 %v1390
    %v1532 = vunpack.c.h.b16 %v1390
    %v1533 = vunpack.c.l.b16 %v1391
    %v1534 = vunpack.c.h.b16 %v1391
    %v1535 = vunpack.c.l.b16 %v1392
    %v1536 = vunpack.c.h.b16 %v1392
    %v1537 = vunpack.c.l.b16 %v1393
    %v1538 = vunpack.c.h.b16 %v1393
    %v1539 = vunpack.c.l.b16 %v1394
    %v1540 = vunpack.c.h.b16 %v1394
    %v1541 = vunpack.c.l.b16 %v1395
    %v1542 = vunpack.c.h.b16 %v1395
    %v1543 = vunpack.c.l.b16 %v1396
    %v1544 = vunpack.c.h.b16 %v1396
    %v1545 = vunpack.c.l.b16 %v1397
    %v1546 = vunpack.c.h.b16 %v1397
    %v1547 = vunpack.c.l.b16 %v1398
    %v1548 = vunpack.c.h.b16 %v1398
    %v1549 = vunpack.c.l.b16 %v1399
    %v1550 = vunpack.c.h.b16 %v1399
    %v1551 = vunpack.c.l.b16 %v1400
    %v1552 = vunpack.c.h.b16 %v1400
    %v1553 = vunpack.c.l.b16 %v1401
    %v1554 = vunpack.c.h.b16 %v1401
    %v1555 = vunpack.c.l.b16 %v1402
    %v1556 = vunpack.c.h.b16 %v1402
    %v1557 = vunpack.c.l.b16 %v1403
    %v1558 = vunpack.c.h.b16 %v1403
    %v1559 = vunpack.c.l.b16 %v1404
    %v1560 = vunpack.c.h.b16 %v1404
    %v1561 = vunpack.c.l.b16 %v1405
    %v1562 = vunpack.c.h.b16 %v1405
    %v1563 = vunpack.c.l.b16 %v1406
    %v1564 = vunpack.c.h.b16 %v1406
    %v1565 = vunpack.c.l.b16 %v1407
    %v1566 = vunpack.c.h.b16 %v1407
    %v1567 = vunpack.c.l.b16 %v1408
    %v1568 = vunpack.c.h.b16 %v1408
    %v1569 = vunpack.c.l.b16 %v1409
    %v1570 = vunpack.c.h.b16 %v1409
    %v1571 = vunpack.c.l.b16 %v1410
    %v1572 = vunpack.c.h.b16 %v1410
    %v1573 = vunpack.c.l.b16 %v1411
    %v1574 = vunpack.c.h.b16 %v1411
    %v1575 = vunpack.c.l.b16 %v1412
    %v1576 = vunpack.c.h.b16 %v1412
    %v1577 = vunpack.c.l.b16 %v1413
    %v1578 = vunpack.c.h.b16 %v1413
    %v1579 = vunpack.c.l.b16 %v1414
    %v1580 = vunpack.c.h.b16 %v1414
    %v1581 = vunpack.c.l.b16 %v1415
    %v1582 = vunpack.c.h.b16 %v1415
    %v1583 = vunpack.c.l.b16 %v1416
    %v1584 = vunpack.c.h.b16 %v1416
    %v1585 = vunpack.c.l.b16 %v1417
    %v1586 = vunpack.c.h.b16 %v1417
    %v1587 = vunpack.c.l.b16 %v1418
    %v1588 = vunpack.c.h.b16 %v1418
    %v1589 = vunpack.c.l.b16 %v1419
    %v1590 = vunpack.c.h.b16 %v1419
    %v1591 = vunpack.c.l.b16 %v1420
    %v1592 = vunpack.c.h.b16 %v1420
    %v1593 = vunpack.c.l.b16 %v1421
    %v1594 = vunpack.c.h.b16 %v1421
    %v1595 = vunpack.c.l.b16 %v1422
    %v1596 = vunpack.c.h.b16 %v1422
    %v1597 = vunpack.c.l.b16 %v1423
    %v1598 = vunpack.c.h.b16 %v1423
    %v1599 = vunpack.c.l.b16 %v1424
    %v1600 = vunpack.c.h.b16 %v1424
    %v1601 = vunpack.c.l.b16 %v1425
    %v1602 = vunpack.c.h.b16 %v1425
    %v1603 = vunpack.c.l.b16 %v1426
    %v1604 = vunpack.c.h.b16 %v1426
    %v1605 = vunpack.c.l.b16 %v1427
    %v1606 = vunpack.c.h.b16 %v1427
    %v1607 = vunpack.c.l.b16 %v1428
    %v1608 = vunpack.c.h.b16 %v1428
    %v1609 = vunpack.c.l.b16 %v1429
    %v1610 = vunpack.c.h.b16 %v1429
    %v1611 = vunpack.c.l.b16 %v1430
    %v1612 = vunpack.c.h.b16 %v1430
    %v1613 = vunpack.c.l.b16 %v1431
    %v1614 = vunpack.c.h.b16 %v1431
    %v1615 = vunpack.c.l.b16 %v1432
    %v1616 = vunpack.c.h.b16 %v1432
    %v1617 = vunpack.c.l.b16 %v1433
    %v1618 = vunpack.c.h.b16 %v1433
    %v1619 = vunpack.c.l.b16 %v1434
    %v1620 = vunpack.c.h.b16 %v1434
    %v1621 = vunpack.c.l.b16 %v1435
    %v1622 = vunpack.c.h.b16 %v1435
    %v1623 = vunpack.c.l.b16 %v1436
    %v1624 = vunpack.c.h.b16 %v1436
    %v1625 = vunpack.c.l.b16 %v1437
    %v1626 = vunpack.c.h.b16 %v1437
    %v1627 = vunpack.c.l.b16 %v1438
    %v1628 = vunpack.c.h.b16 %v1438
    %v1629 = vunpack.c.l.b16 %v1439
    %v1630 = vunpack.c.h.b16 %v1439
    %v1631 = vunpack.c.l.b16 %v1440
    %v1632 = vunpack.c.h.b16 %v1440
    %v1633 = vunpack.c.l.b16 %v1441
    %v1634 = vunpack.c.h.b16 %v1441
    %v1635 = vunpack.c.l.b16 %v1442
    %v1636 = vunpack.c.h.b16 %v1442
    %v1637 = vunpack.c.l.b16 %v1443
    %v1638 = vunpack.c.h.b16 %v1443
    %v1639 = vunpack.c.l.b16 %v1444
    %v1640 = vunpack.c.h.b16 %v1444
    %v1641 = vunpack.c.l.b16 %v1445
    %v1642 = vunpack.c.h.b16 %v1445
    %v1643 = vunpack.c.l.b16 %v1446
    %v1644 = vunpack.c.h.b16 %v1446
    %v1645 = vpack.c.b16 %v1519, %v1517
    %v1646 = vpack.c.b16 %v1520, %v1518
    %v1647 = vpack.c.b16 %v1523, %v1521
    %v1648 = vpack.c.b16 %v1524, %v1522
    %v1649 = vpack.c.b16 %v1527, %v1525
    %v1650 = vpack.c.b16 %v1528, %v1526
    %v1651 = vpack.c.b16 %v1531, %v1529
    %v1652 = vpack.c.b16 %v1532, %v1530
    %v1653 = vpack.c.b16 %v1535, %v1533
    %v1654 = vpack.c.b16 %v1536, %v1534
    %v1655 = vpack.c.b16 %v1539, %v1537
    %v1656 = vpack.c.b16 %v1540, %v1538
    %v1657 = vpack.c.b16 %v1543, %v1541
    %v1658 = vpack.c.b16 %v1544, %v1542
    %v1659 = vpack.c.b16 %v1547, %v1545
    %v1660 = vpack.c.b16 %v1548, %v1546
    %v1661 = vpack.c.b16 %v1551, %v1549
    %v1662 = vpack.c.b16 %v1552, %v1550
    %v1663 = vpack.c.b16 %v1555, %v1553
    %v1664 = vpack.c.b16 %v1556, %v1554
    %v1665 = vpack.c.b16 %v1559, %v1557
    %v1666 = vpack.c.b16 %v1560, %v1558
    %v1667 = vpack.c.b16 %v1563, %v1561
    %v1668 = vpack.c.b16 %v1564, %v1562
    %v1669 = vpack.c.b16 %v1567, %v1565
    %v1670 = vpack.c.b16 %v1568, %v1566
    %v1671 = vpack.c.b16 %v1571, %v1569
    %v1672 = vpack.c.b16 %v1572, %v1570
    %v1673 = vpack.c.b16 %v1575, %v1573
    %v1674 = vpack.c.b16 %v1576, %v1574
    %v1675 = vpack.c.b16 %v1579, %v1577
    %v1676 = vpack.c.b16 %v1580, %v1578
    %v1677 = vpack.c.b16 %v1583, %v1581
    %v1678 = vpack.c.b16 %v1584, %v1582
    %v1679 = vpack.c.b16 %v1587, %v1585
    %v1680 = vpack.c.b16 %v1588, %v1586
    %v1681 = vpack.c.b16 %v1591, %v1589
    %v1682 = vpack.c.b16 %v1592, %v1590
    %v1683 = vpack.c.b16 %v1595, %v1593
    %v1684 = vpack.c.b16 %v1596, %v1594
    %v1685 = vpack.c.b16 %v1599, %v1597
    %v1686 = vpack.c.b16 %v1600, %v1598
    %v1687 = vpack.c.b16 %v1603, %v1601
    %v1688 = vpack.c.b16 %v1604, %v1602
    %v1689 = vpack.c.b16 %v1607, %v1605
    %v1690 = vpack.c.b16 %v1608, %v1606
    %v1691 = vpack.c.b16 %v1611, %v1609
    %v1692 = vpack.c.b16 %v1612, %v1610
    %v1693 = vpack.c.b16 %v1615, %v1613
    %v1694 = vpack.c.b16 %v1616, %v1614
    %v1695 = vpack.c.b16 %v1619, %v1617
    %v1696 = vpack.c.b16 %v1620, %v1618
    %v1697 = vpack.c.b16 %v1623, %v1621
    %v1698 = vpack.c.b16 %v1624, %v1622
    %v1699 = vpack.c.b16 %v1627, %v1625
    %v1700 = vpack.c.b16 %v1628, %v1626
    %v1701 = vpack.c.b16 %v1631, %v1629
    %v1702 = vpack.c.b16 %v1632, %v1630
    %v1703 = vpack.c.b16 %v1635, %v1633
    %v1704 = vpack.c.b16 %v1636, %v1634
    %v1705 = vpack.c.b16 %v1639, %v1637
    %v1706 = vpack.c.b16 %v1640, %v1638
    %v1707 = vpack.c.b16 %v1643, %v1641
    %v1708 = vpack.c.b16 %v1644, %v1642
    %1773 = vmatpush.bf16.msra.mxu0 %v1659
    %1774 = vmatpush.bf16.msra.mxu0 %v1657
    %1775 = vmatpush.bf16.msra.mxu0 %v1655
    %1776 = vmatpush.bf16.msra.mxu0 %v1653
    %1777 = vmatpush.bf16.msra.mxu0 %v1651
    %1778 = vmatpush.bf16.msra.mxu0 %v1649
    %1779 = vmatpush.bf16.msra.mxu0 %v1647
    %1780 = vmatpush.bf16.msra.mxu0 %v1645
    %1781 = vmatmul.bf16.gmra.mxu0 %v1379
    %v1782 = vpop.f32.mrf.mxu0
    %v1783 = vadd.f32 %v1449, %v1782
    %v1784 = vpop.f32.mrf.mxu0
    %v1785 = vadd.f32 %v1449, %v1784
    %1786 = vdwg.mxu0
    %1787 = vmatpush.bf16.msra.mxu0 %v1675
    %1788 = vmatpush.bf16.msra.mxu0 %v1673
    %1789 = vmatpush.bf16.msra.mxu0 %v1671
    %1790 = vmatpush.bf16.msra.mxu0 %v1669
    %1791 = vmatpush.bf16.msra.mxu0 %v1667
    %1792 = vmatpush.bf16.msra.mxu0 %v1665
    %1793 = vmatpush.bf16.msra.mxu0 %v1663
    %1794 = vmatpush.bf16.msra.mxu0 %v1661
    %1795 = vmatmul.bf16.gmra.mxu0 %v1380
    %v1796 = vpop.f32.mrf.mxu0
    %v1797 = vadd.f32 %v1783, %v1796
    %v1798 = vpop.f32.mrf.mxu0
    %v1799 = vadd.f32 %v1785, %v1798
    %1800 = vdwg.mxu0
    %1801 = vmatpush.bf16.msra.mxu0 %v1691
    %1802 = vmatpush.bf16.msra.mxu0 %v1689
    %1803 = vmatpush.bf16.msra.mxu0 %v1687
    %1804 = vmatpush.bf16.msra.mxu0 %v1685
    %1805 = vmatpush.bf16.msra.mxu0 %v1683
    %1806 = vmatpush.bf16.msra.mxu0 %v1681
    %1807 = vmatpush.bf16.msra.mxu0 %v1679
    %1808 = vmatpush.bf16.msra.mxu0 %v1677
    %1809 = vmatmul.bf16.gmra.mxu0 %v1381
    %v1810 = vpop.f32.mrf.mxu0
    %v1811 = vadd.f32 %v1797, %v1810
    %v1812 = vpop.f32.mrf.mxu0
    %v1813 = vadd.f32 %v1799, %v1812
    %1814 = vdwg.mxu0
    %1815 = vmatpush.bf16.msra.mxu0 %v1707
    %1816 = vmatpush.bf16.msra.mxu0 %v1705
    %1817 = vmatpush.bf16.msra.mxu0 %v1703
    %1818 = vmatpush.bf16.msra.mxu0 %v1701
    %1819 = vmatpush.bf16.msra.mxu0 %v1699
    %1820 = vmatpush.bf16.msra.mxu0 %v1697
    %1821 = vmatpush.bf16.msra.mxu0 %v1695
    %1822 = vmatpush.bf16.msra.mxu0 %v1693
    %1823 = vmatmul.bf16.gmra.mxu0 %v1382
    %v1824 = vpop.f32.mrf.mxu0
    %v1825 = vadd.f32 %v1811, %v1824
    %v1826 = vpop.f32.mrf.mxu0
    %v1827 = vadd.f32 %v1813, %v1826
    %1828 = vdwg.mxu0
    %1829 = vmatpush.bf16.msra.mxu0 %v1660
    %1830 = vmatpush.bf16.msra.mxu0 %v1658
    %1831 = vmatpush.bf16.msra.mxu0 %v1656
    %1832 = vmatpush.bf16.msra.mxu0 %v1654
    %1833 = vmatpush.bf16.msra.mxu0 %v1652
    %1834 = vmatpush.bf16.msra.mxu0 %v1650
    %1835 = vmatpush.bf16.msra.mxu0 %v1648
    %1836 = vmatpush.bf16.msra.mxu0 %v1646
    %1837 = vmatmul.bf16.gmra.mxu0 %v1379
    %v1838 = vpop.f32.mrf.mxu0
    %v1839 = vadd.f32 %v1450, %v1838
    %v1840 = vpop.f32.mrf.mxu0
    %v1841 = vadd.f32 %v1450, %v1840
    %1842 = vdwg.mxu0
    %1843 = vmatpush.bf16.msra.mxu0 %v1676
    %1844 = vmatpush.bf16.msra.mxu0 %v1674
    %1845 = vmatpush.bf16.msra.mxu0 %v1672
    %1846 = vmatpush.bf16.msra.mxu0 %v1670
    %1847 = vmatpush.bf16.msra.mxu0 %v1668
    %1848 = vmatpush.bf16.msra.mxu0 %v1666
    %1849 = vmatpush.bf16.msra.mxu0 %v1664
    %1850 = vmatpush.bf16.msra.mxu0 %v1662
    %1851 = vmatmul.bf16.gmra.mxu0 %v1380
    %v1852 = vpop.f32.mrf.mxu0
    %v1853 = vadd.f32 %v1839, %v1852
    %v1854 = vpop.f32.mrf.mxu0
    %v1855 = vadd.f32 %v1841, %v1854
    %1856 = vdwg.mxu0
    %1857 = vmatpush.bf16.msra.mxu0 %v1692
    %1858 = vmatpush.bf16.msra.mxu0 %v1690
    %1859 = vmatpush.bf16.msra.mxu0 %v1688
    %1860 = vmatpush.bf16.msra.mxu0 %v1686
    %1861 = vmatpush.bf16.msra.mxu0 %v1684
    %1862 = vmatpush.bf16.msra.mxu0 %v1682
    %1863 = vmatpush.bf16.msra.mxu0 %v1680
    %1864 = vmatpush.bf16.msra.mxu0 %v1678
    %1865 = vmatmul.bf16.gmra.mxu0 %v1381
    %v1866 = vpop.f32.mrf.mxu0
    %v1867 = vadd.f32 %v1853, %v1866
    %v1868 = vpop.f32.mrf.mxu0
    %v1869 = vadd.f32 %v1855, %v1868
    %1870 = vdwg.mxu0
    %1871 = vmatpush.bf16.msra.mxu0 %v1708
    %1872 = vmatpush.bf16.msra.mxu0 %v1706
    %1873 = vmatpush.bf16.msra.mxu0 %v1704
    %1874 = vmatpush.bf16.msra.mxu0 %v1702
    %1875 = vmatpush.bf16.msra.mxu0 %v1700
    %1876 = vmatpush.bf16.msra.mxu0 %v1698
    %1877 = vmatpush.bf16.msra.mxu0 %v1696
    %1878 = vmatpush.bf16.msra.mxu0 %v1694
    %1879 = vmatmul.bf16.gmra.mxu0 %v1382
    %v1880 = vpop.f32.mrf.mxu0
    %v1881 = vadd.f32 %v1867, %v1880
    %v1882 = vpop.f32.mrf.mxu0
    %v1883 = vadd.f32 %v1869, %v1882
    %1884 = vdwg.mxu0
    %v1885 = vmax.f32 %v1825, 0.0
    %v1886 = vmax.f32 %v1881, 0.0
    %v1887 = vmax.f32 %v1827, 0.0
    %v1888 = vmax.f32 %v1883, 0.0
    %v1889 = vpack.c.bf16 %v1887, %v1885
    %v1890 = vpack.c.bf16 %v1888, %v1886
    %v1891 = vld [vmem:[#allocation6] sm:$0xf]
    %v1892 = vld [vmem:[#allocation6 + $0x4] sm:$0xf]
    %v1893 = vld [vmem:[#allocation6 + $0x8] sm:$0xf]
    %v1894 = vld [vmem:[#allocation6 + $0xc] sm:$0xf]
    %v1895 = vld [vmem:[#allocation6 + $0x10] sm:$0xf]
    %v1896 = vld [vmem:[#allocation6 + $0x14] sm:$0xf]
    %v1897 = vld [vmem:[#allocation6 + $0x18] sm:$0xf]
    %v1898 = vld [vmem:[#allocation6 + $0x1c] sm:$0xf]
    %v1899 = vld [vmem:[#allocation6 + $0x20] sm:$0xf]
    %v1900 = vld [vmem:[#allocation6 + $0x24] sm:$0xf]
    %v1901 = vld [vmem:[#allocation6 + $0x28] sm:$0xf]
    %v1902 = vld [vmem:[#allocation6 + $0x2c] sm:$0xf]
    %v1903 = vld [vmem:[#allocation6 + $0x30] sm:$0xf]
    %v1904 = vld [vmem:[#allocation6 + $0x34] sm:$0xf]
    %v1905 = vld [vmem:[#allocation6 + $0x38] sm:$0xf]
    %v1906 = vld [vmem:[#allocation6 + $0x3c] sm:$0xf]
    %v1907 = vld [vmem:[#allocation6 + $0x40] sm:$0xf]
    %v1908 = vld [vmem:[#allocation6 + $0x44] sm:$0xf]
    %v1909 = vld [vmem:[#allocation6 + $0x48] sm:$0xf]
    %v1910 = vld [vmem:[#allocation6 + $0x4c] sm:$0xf]
    %v1911 = vld [vmem:[#allocation6 + $0x50] sm:$0xf]
    %v1912 = vld [vmem:[#allocation6 + $0x54] sm:$0xf]
    %v1913 = vld [vmem:[#allocation6 + $0x58] sm:$0xf]
    %v1914 = vld [vmem:[#allocation6 + $0x5c] sm:$0xf]
    %v1915 = vld [vmem:[#allocation6 + $0x60] sm:$0xf]
    %v1916 = vld [vmem:[#allocation6 + $0x64] sm:$0xf]
    %v1917 = vld [vmem:[#allocation6 + $0x68] sm:$0xf]
    %v1918 = vld [vmem:[#allocation6 + $0x6c] sm:$0xf]
    %v1919 = vld [vmem:[#allocation6 + $0x70] sm:$0xf]
    %v1920 = vld [vmem:[#allocation6 + $0x74] sm:$0xf]
    %v1921 = vld [vmem:[#allocation6 + $0x78] sm:$0xf]
    %v1922 = vld [vmem:[#allocation6 + $0x7c] sm:$0xf]
    %v1923 = vld [vmem:[%s6 + $0x6] sm:$0x1]
    %v1925 = vperm.slane %v1923, 0
    %v1959 = vunpack.c.l.b16 %v1891
    %v1960 = vunpack.c.l.b16 %v1892
    %v1961 = vunpack.c.l.b16 %v1893
    %v1962 = vunpack.c.l.b16 %v1894
    %v1963 = vunpack.c.l.b16 %v1895
    %v1964 = vunpack.c.l.b16 %v1896
    %v1965 = vunpack.c.l.b16 %v1897
    %v1966 = vunpack.c.l.b16 %v1898
    %v1967 = vunpack.c.l.b16 %v1899
    %v1968 = vunpack.c.l.b16 %v1900
    %v1969 = vunpack.c.l.b16 %v1901
    %v1970 = vunpack.c.l.b16 %v1902
    %v1971 = vunpack.c.l.b16 %v1903
    %v1972 = vunpack.c.l.b16 %v1904
    %v1973 = vunpack.c.l.b16 %v1905
    %v1974 = vunpack.c.l.b16 %v1906
    %v1975 = vunpack.c.l.b16 %v1907
    %v1976 = vunpack.c.l.b16 %v1908
    %v1977 = vunpack.c.l.b16 %v1909
    %v1978 = vunpack.c.l.b16 %v1910
    %v1979 = vunpack.c.l.b16 %v1911
    %v1980 = vunpack.c.l.b16 %v1912
    %v1981 = vunpack.c.l.b16 %v1913
    %v1982 = vunpack.c.l.b16 %v1914
    %v1983 = vunpack.c.l.b16 %v1915
    %v1984 = vunpack.c.l.b16 %v1916
    %v1985 = vunpack.c.l.b16 %v1917
    %v1986 = vunpack.c.l.b16 %v1918
    %v1987 = vunpack.c.l.b16 %v1919
    %v1988 = vunpack.c.l.b16 %v1920
    %v1989 = vunpack.c.l.b16 %v1921
    %v1990 = vunpack.c.l.b16 %v1922
    %v1991 = vpack.c.b16 %v1960, %v1959
    %v1992 = vpack.c.b16 %v1962, %v1961
    %v1993 = vpack.c.b16 %v1964, %v1963
    %v1994 = vpack.c.b16 %v1966, %v1965
    %v1995 = vpack.c.b16 %v1968, %v1967
    %v1996 = vpack.c.b16 %v1970, %v1969
    %v1997 = vpack.c.b16 %v1972, %v1971
    %v1998 = vpack.c.b16 %v1974, %v1973
    %v1999 = vpack.c.b16 %v1976, %v1975
    %v2000 = vpack.c.b16 %v1978, %v1977
    %v2001 = vpack.c.b16 %v1980, %v1979
    %v2002 = vpack.c.b16 %v1982, %v1981
    %v2003 = vpack.c.b16 %v1984, %v1983
    %v2004 = vpack.c.b16 %v1986, %v1985
    %v2005 = vpack.c.b16 %v1988, %v1987
    %v2006 = vpack.c.b16 %v1990, %v1989
    %2023 = vmatpush.bf16.msra.mxu0 %v1998
    %2024 = vmatpush.bf16.msra.mxu0 %v1997
    %2025 = vmatpush.bf16.msra.mxu0 %v1996
    %2026 = vmatpush.bf16.msra.mxu0 %v1995
    %2027 = vmatpush.bf16.msra.mxu0 %v1994
    %2028 = vmatpush.bf16.msra.mxu0 %v1993
    %2029 = vmatpush.bf16.msra.mxu0 %v1992
    %2030 = vmatpush.bf16.msra.mxu0 %v1991
    %2031 = vmatmul.bf16.gmra.mxu0 %v1889
    %v2032 = vpop.f32.mrf.mxu0
    %v2033 = vadd.f32 %v1925, %v2032
    %v2034 = vpop.f32.mrf.mxu0
    %v2035 = vadd.f32 %v1925, %v2034
    %2036 = vdwg.mxu0
    %2037 = vmatpush.bf16.msra.mxu0 %v2006
    %2038 = vmatpush.bf16.msra.mxu0 %v2005
    %2039 = vmatpush.bf16.msra.mxu0 %v2004
    %2040 = vmatpush.bf16.msra.mxu0 %v2003
    %2041 = vmatpush.bf16.msra.mxu0 %v2002
    %2042 = vmatpush.bf16.msra.mxu0 %v2001
    %2043 = vmatpush.bf16.msra.mxu0 %v2000
    %2044 = vmatpush.bf16.msra.mxu0 %v1999
    %2045 = vmatmul.bf16.gmra.mxu0 %v1890
    %v2046 = vpop.f32.mrf.mxu0
    %v2047 = vadd.f32 %v2033, %v2046
    %v2048 = vpop.f32.mrf.mxu0
    %v2049 = vadd.f32 %v2035, %v2048
    %2050 = vdwg.mxu0
    %v2051 = vmax.f32 %v2047, 0.0
    %v2052 = vmax.f32 %v2049, 0.0
    %v2053 = vpack.c.bf16 %v2052, %v2051
    %v2054 = vld [vmem:[%s4] sm:$0xf]
    %v2055 = vld [vmem:[%s4 + $0x4] sm:$0xf]
    %v2056 = vld [vmem:[%s4 + $0x8] sm:$0xf]
    %v2057 = vld [vmem:[%s4 + $0xc] sm:$0xf]
    %v2058 = vld [vmem:[%s4 + $0x10] sm:$0xf]
    %v2059 = vld [vmem:[%s4 + $0x14] sm:$0xf]
    %v2060 = vld [vmem:[%s4 + $0x18] sm:$0xf]
    %v2061 = vld [vmem:[%s4 + $0x1c] sm:$0xf]
    %v2062 = vld [vmem:[%s4 + $0x20] sm:$0xf]
    %v2063 = vld [vmem:[%s4 + $0x24] sm:$0xf]
    %v2064 = vld [vmem:[%s4 + $0x28] sm:$0xf]
    %v2065 = vld [vmem:[%s4 + $0x2c] sm:$0xf]
    %v2066 = vld [vmem:[%s4 + $0x30] sm:$0xf]
    %v2067 = vld [vmem:[%s4 + $0x34] sm:$0xf]
    %v2068 = vld [vmem:[%s4 + $0x38] sm:$0xf]
    %v2069 = vld [vmem:[%s4 + $0x3c] sm:$0xf]
    %v2070 = vld [vmem:[%s6 + $0x7] sm:$0x1]
    %v2072 = vperm.slane %v2070, 0
    %v2090 = vunpack.c.l.b16 %v2054
    %v2091 = vunpack.c.l.b16 %v2055
    %v2092 = vunpack.c.l.b16 %v2056
    %v2093 = vunpack.c.l.b16 %v2057
    %v2094 = vunpack.c.l.b16 %v2058
    %v2095 = vunpack.c.l.b16 %v2059
    %v2096 = vunpack.c.l.b16 %v2060
    %v2097 = vunpack.c.l.b16 %v2061
    %v2098 = vunpack.c.l.b16 %v2062
    %v2099 = vunpack.c.l.b16 %v2063
    %v2100 = vunpack.c.l.b16 %v2064
    %v2101 = vunpack.c.l.b16 %v2065
    %v2102 = vunpack.c.l.b16 %v2066
    %v2103 = vunpack.c.l.b16 %v2067
    %v2104 = vunpack.c.l.b16 %v2068
    %v2105 = vunpack.c.l.b16 %v2069
    %v2106 = vpack.c.b16 %v2091, %v2090
    %v2107 = vpack.c.b16 %v2093, %v2092
    %v2108 = vpack.c.b16 %v2095, %v2094
    %v2109 = vpack.c.b16 %v2097, %v2096
    %v2110 = vpack.c.b16 %v2099, %v2098
    %v2111 = vpack.c.b16 %v2101, %v2100
    %v2112 = vpack.c.b16 %v2103, %v2102
    %v2113 = vpack.c.b16 %v2105, %v2104
    %2122 = vmatpush.bf16.msra.mxu0 %v2113
    %2123 = vmatpush.bf16.msra.mxu0 %v2112
    %2124 = vmatpush.bf16.msra.mxu0 %v2111
    %2125 = vmatpush.bf16.msra.mxu0 %v2110
    %2126 = vmatpush.bf16.msra.mxu0 %v2109
    %2127 = vmatpush.bf16.msra.mxu0 %v2108
    %2128 = vmatpush.bf16.msra.mxu0 %v2107
    %2129 = vmatpush.bf16.msra.mxu0 %v2106
    %2130 = vmatmul.bf16.gmra.mxu0 %v2053
    %v2131 = vpop.f32.mrf.mxu0
    %v2132 = vadd.f32 %v2072, %v2131
    %v2133 = vpop.f32.mrf.mxu0
    %v2134 = vadd.f32 %v2072, %v2133
    %2135 = vdwg.mxu0
    %v2136 = vmax.f32 %v2132, 0.0
    %v2137 = vmax.f32 %v2134, 0.0
    %v2138 = vpack.c.bf16 %v2137, %v2136
    %v2139 = vld [vmem:[#allocation7] sm:$0xf]
    %v2140 = vld [vmem:[#allocation7 + $0x4] sm:$0xf]
    %v2141 = vld [vmem:[#allocation7 + $0x8] sm:$0xf]
    %v2142 = vld [vmem:[#allocation7 + $0xc] sm:$0xf]
    %v2143 = vld [vmem:[#allocation7 + $0x10] sm:$0xf]
    %v2144 = vld [vmem:[#allocation7 + $0x14] sm:$0xf]
    %v2145 = vld [vmem:[#allocation7 + $0x18] sm:$0xf]
    %v2146 = vld [vmem:[#allocation7 + $0x1c] sm:$0xf]
    %v2147 = vld [vmem:[#allocation7 + $0x20] sm:$0xf]
    %v2148 = vld [vmem:[#allocation7 + $0x24] sm:$0xf]
    %v2149 = vld [vmem:[#allocation7 + $0x28] sm:$0xf]
    %v2150 = vld [vmem:[#allocation7 + $0x2c] sm:$0xf]
    %v2151 = vld [vmem:[#allocation7 + $0x30] sm:$0xf]
    %v2152 = vld [vmem:[#allocation7 + $0x34] sm:$0xf]
    %v2153 = vld [vmem:[#allocation7 + $0x38] sm:$0xf]
    %v2154 = vld [vmem:[#allocation7 + $0x3c] sm:$0xf]
    %v2155 = vld [vmem:[%s6 + $0x8] sm:$0x1]
    %v2157 = vperm.slane %v2155, 0
    %v2175 = vunpack.c.l.b16 %v2139
    %v2176 = vunpack.c.l.b16 %v2140
    %v2177 = vunpack.c.l.b16 %v2141
    %v2178 = vunpack.c.l.b16 %v2142
    %v2179 = vunpack.c.l.b16 %v2143
    %v2180 = vunpack.c.l.b16 %v2144
    %v2181 = vunpack.c.l.b16 %v2145
    %v2182 = vunpack.c.l.b16 %v2146
    %v2183 = vunpack.c.l.b16 %v2147
    %v2184 = vunpack.c.l.b16 %v2148
    %v2185 = vunpack.c.l.b16 %v2149
    %v2186 = vunpack.c.l.b16 %v2150
    %v2187 = vunpack.c.l.b16 %v2151
    %v2188 = vunpack.c.l.b16 %v2152
    %v2189 = vunpack.c.l.b16 %v2153
    %v2190 = vunpack.c.l.b16 %v2154
    %v2191 = vpack.c.b16 %v2176, %v2175
    %v2192 = vpack.c.b16 %v2178, %v2177
    %v2193 = vpack.c.b16 %v2180, %v2179
    %v2194 = vpack.c.b16 %v2182, %v2181
    %v2195 = vpack.c.b16 %v2184, %v2183
    %v2196 = vpack.c.b16 %v2186, %v2185
    %v2197 = vpack.c.b16 %v2188, %v2187
    %v2198 = vpack.c.b16 %v2190, %v2189
    %2207 = vmatpush.bf16.msra.mxu0 %v2198
    %2208 = vmatpush.bf16.msra.mxu0 %v2197
    %2209 = vmatpush.bf16.msra.mxu0 %v2196
    %2210 = vmatpush.bf16.msra.mxu0 %v2195
    %2211 = vmatpush.bf16.msra.mxu0 %v2194
    %2212 = vmatpush.bf16.msra.mxu0 %v2193
    %2213 = vmatpush.bf16.msra.mxu0 %v2192
    %2214 = vmatpush.bf16.msra.mxu0 %v2191
    %2215 = vmatmul.bf16.gmra.mxu0 %v2138
    %v2216 = vpop.f32.mrf.mxu0
    %v2217 = vadd.f32 %v2157, %v2216
    %v2218 = vpop.f32.mrf.mxu0
    %v2219 = vadd.f32 %v2157, %v2218
    %2220 = vdwg.mxu0
    %v2221 = vsub.f32 0.0, %v2217
    %v2222 = vsub.f32 0.0, %v2219
    %v2223 = vmul.f32 %v2221, 1.442695
    %v2224 = vpow.pop %v2223
    %v2225 = vmul.f32 %v2222, 1.442695
    %v2226 = vpow.pop %v2225
    %v2227 = vadd.f32 %v2224, 1.0
    %v2228 = vadd.f32 %v2226, 1.0
    %v2229 = vrcp.pop %v2227
    %v2230 = vmul.f32 %v2227, %v2229
    %v2231 = vsub.f32 1.0, %v2230
    %v2232 = vmul.f32 %v2229, %v2231
    %v2233 = vadd.f32 %v2229, %v2232
    %vm2234 = vweird.f32 %v2227
    %vm2235 = vweird.f32 %v2229
    %vm2236 = vmor %vm2234, %vm2235
    %v2237 = vsel %vm2236, %v2229, %v2233
    %v2238 = vand.u32 2147483647, %v2227
    %vm2239 = vcmp.eq.f32.partialorder %v2238, 8.507059e+37
    %v2240 = vand.u32 %v2227, 2147483648
    %v2241 = vor.u32 1.1754944e-38, %v2240
    %v2242 = vsel %vm2239, %v2241, %v2237
    %v2243 = vmul.f32 1.0, %v2242
    %v2244 = vrcp.pop %v2228
    %v2245 = vmul.f32 %v2228, %v2244
    %v2246 = vsub.f32 1.0, %v2245
    %v2247 = vmul.f32 %v2244, %v2246
    %v2248 = vadd.f32 %v2244, %v2247
    %vm2249 = vweird.f32 %v2228
    %vm2250 = vweird.f32 %v2244
    %vm2251 = vmor %vm2249, %vm2250
    %v2252 = vsel %vm2251, %v2244, %v2248
    %v2253 = vand.u32 2147483647, %v2228
    %vm2254 = vcmp.eq.f32.partialorder %v2253, 8.507059e+37
    %v2255 = vand.u32 %v2228, 2147483648
    %v2256 = vor.u32 1.1754944e-38, %v2255
    %v2257 = vsel %vm2254, %v2256, %v2252
    %v2258 = vmul.f32 1.0, %v2257
    %vm2259 = vcmask 7168
    %2260 = vst.msk [vmem:[%s7] sm:$0xff] %vm2259, %v2243
    %2261 = vst.msk [vmem:[%s7 + $0x8] sm:$0xff] %vm2259, %v2258
    // Predicated region
    $region46: #{bert_scorer_head.1} parent=1 // pred_check
      _
    $region47: #{bert_scorer_head.1} parent=1 // pred_check_branch
      %2263 = sbr.rel (0) target = $region49
    $region48: #{bert_scorer_head.1} parent=1 // pred_region
      _
    $region49: #{bert_scorer_head.1} parent=1 // pred_fallthru
      _
    // Predicated region
    $region50: #{bert_scorer_head.1} parent=1 // pred_check
      _
    $region51: #{bert_scorer_head.1} parent=1 // pred_check_branch
      %2265 = sbr.rel (0) target = $region53
    $region52: #{bert_scorer_head.1} parent=1 // pred_region
      _
    $region53: #{bert_scorer_head.1} parent=1 // pred_fallthru
      _
    %2266 = vsyncpa [#allocation3], 1
    %2267 = vsyncpa [#allocation5], 1
    %2268 = vsyncpa [#allocation8], 1

</llo_original>
